<compile_context>
chip_gen: v5e
topology: v5e:2x2
jax: 0.10.0
libtpu: 0.0.40
codegen_flags: <defaults>
</compile_context>

<pallas_src>
import functools

import jax
import jax.numpy as jnp
from jax.experimental import pallas as pl
from jax.experimental.pallas import tpu as pltpu

NEGATIVE_SLOPE = 0.01
BN_EPS = 1e-5


def _cdiv(a, b):
    return (a + b - 1) // b


def _round_up(n, m):
    return ((n + m - 1) // m) * m


def _leaky_relu(x, slope=NEGATIVE_SLOPE):
    # max(x, slope*x) == leaky_relu for 0 < slope < 1
    return jnp.maximum(x, slope * x)


def ec_predictor_kernel(x_ref, w1_ref, b1_ref, w2_ref, b2_ref, w3_ref, b3_ref,
                        o_ref):
    # x tile arrives in native f32 (single HBM read); cast to bf16 in-register
    # so the MXU runs at full rate without any wrapper-side HBM cast pass.
    x = x_ref[...].astype(w1_ref.dtype)

    # fc1 (+ folded eval-mode BatchNorm) + leaky_relu (f32 accum, f32 bias)
    h = jnp.dot(x, w1_ref[...], preferred_element_type=jnp.float32) + b1_ref[...]
    h = _leaky_relu(h)

    # dropout (eval) = identity
    # fc2 + leaky_relu
    h = jnp.dot(h.astype(w2_ref.dtype), w2_ref[...],
                preferred_element_type=jnp.float32) + b2_ref[...]
    h = _leaky_relu(h)

    # dropout (eval) = identity
    # fc3 straight into the narrow (tm, output_dim) output block.
    out = jnp.dot(h.astype(w3_ref.dtype), w3_ref[...],
                  preferred_element_type=jnp.float32) + b3_ref[...]
    o_ref[...] = out.astype(o_ref.dtype)


def _choose_tm(batch, input_dim, tm_cap):
    """Pick a batch-tile size (multiple of 8) from the batch size.

    - Keeps the double-buffered f32 x tile under ~16 MiB so the full pipeline
      (x x2, out x2, resident weights, intermediates) fits the default 32 MiB
      scoped-VMEM budget on v5e/v6e/v7x (v7x physical VMEM is 64 MiB).
    - Guarantees >= 2 grid steps when batch >= 16 so v7x's two TensorCores
      both get work on the "parallel" batch axis.
    - Never pads the batch: the boundary block is masked by Pallas.
    """
    rows_budget = (16 * 1024 * 1024) // (2 * 4 * max(1, input_dim))
    tm_cap = max(8, (min(tm_cap, rows_budget) // 8) * 8)
    if batch <= 8:
        return 8
    min_steps = 2 if batch >= 16 else 1
    steps = max(min_steps, _cdiv(batch, tm_cap))
    return max(8, min(tm_cap, _round_up(_cdiv(batch, steps), 8)))


@functools.partial(jax.jit, static_argnames=("tm_cap",))
def ec_predictor_forward(x, params, *, tm_cap=2048):
    # PyTorch forward starts with x = x.float()
    if x.dtype != jnp.float32:
        x = x.astype(jnp.float32)

    B, input_dim = x.shape
    output_dim = params["w3"].shape[1]

    tm = _choose_tm(B, input_dim, tm_cap)
    grid = (_cdiv(B, tm),)  # boundary block (if any) is masked — no batch pad

    # Full-array, VMEM-resident specs for weights/biases (constant index_map).
    def resident(arr):
        nd = arr.ndim
        return pl.BlockSpec(arr.shape, lambda i, _nd=nd: (0,) * _nd)

    out = pl.pallas_call(
        ec_predictor_kernel,
        out_shape=jax.ShapeDtypeStruct((B, output_dim), jnp.float32),
        grid=grid,
        in_specs=[
            pl.BlockSpec((tm, input_dim), lambda i: (i, 0)),   # x tile (f32)
            resident(params["w1"]),
            resident(params["b1"]),
            resident(params["w2"]),
            resident(params["b2"]),
            resident(params["w3"]),
            resident(params["b3"]),
        ],
        out_specs=pl.BlockSpec((tm, output_dim), lambda i: (i, 0)),
        compiler_params=pltpu.CompilerParams(
            dimension_semantics=("parallel",)),
    )(
        x,
        params["w1"], params["b1"],
        params["w2"], params["b2"],
        params["w3"], params["b3"],
    )

    # PyTorch .squeeze() at the end of forward
    return jnp.squeeze(out)


def ec_predictor_reference(x, params):
    """Pure-JAX reference that mirrors the kernel's exact dtype path."""
    x = x.astype(jnp.float32).astype(jnp.bfloat16)
    h = jnp.dot(x, params["w1"], preferred_element_type=jnp.float32) + params["b1"]
    h = _leaky_relu(h)
    h = jnp.dot(h.astype(jnp.bfloat16), params["w2"],
                preferred_element_type=jnp.float32) + params["b2"]
    h = _leaky_relu(h)
    out = jnp.dot(h.astype(jnp.bfloat16), params["w3"],
                  preferred_element_type=jnp.float32) + params["b3"]
    return jnp.squeeze(out)


def kaiming_normal_fan_out(key, in_features, out_features, negative_slope):
    # PyTorch kaiming_normal_(mode='fan_out', nonlinearity='leaky_relu'):
    #   gain = sqrt(2 / (1 + negative_slope**2)); std = gain / sqrt(fan_out)
    # fan_out of nn.Linear weight (out, in) is out_features.
    gain = jnp.sqrt(2.0 / (1.0 + negative_slope ** 2))
    std = gain / jnp.sqrt(jnp.float32(out_features))
    # Stored transposed: (in_features, out_features) so kernel does x @ W.
    return jax.random.normal(key, (in_features, out_features), jnp.float32) * std


def init_params(key, input_dim, hidden_dim, output_dim):
    k1, k2, k3 = jax.random.split(key, 3)

    w1 = kaiming_normal_fan_out(k1, input_dim, hidden_dim, NEGATIVE_SLOPE)
    b1 = jnp.zeros((1, hidden_dim), jnp.float32)
    w2 = kaiming_normal_fan_out(k2, hidden_dim, hidden_dim, NEGATIVE_SLOPE)
    b2 = jnp.zeros((1, hidden_dim), jnp.float32)
    w3 = kaiming_normal_fan_out(k3, hidden_dim, output_dim, NEGATIVE_SLOPE)
    b3 = jnp.zeros((1, output_dim), jnp.float32)

    # BatchNorm1d eval-mode fold into fc1:
    #   weight=1, bias=0, running_mean=0, running_var=1
    gamma = jnp.ones((hidden_dim,), jnp.float32)
    beta = jnp.zeros((hidden_dim,), jnp.float32)
    running_mean = jnp.zeros((hidden_dim,), jnp.float32)
    running_var = jnp.ones((hidden_dim,), jnp.float32)
    scale = gamma / jnp.sqrt(running_var + BN_EPS)
    shift = beta - running_mean * scale
    w1 = w1 * scale[None, :]
    b1 = b1 * scale[None, :] + shift[None, :]

    return {
        "w1": w1.astype(jnp.bfloat16),
        "b1": b1,                        # biases stay f32 (added to f32 accum)
        "w2": w2.astype(jnp.bfloat16),
        "b2": b2,
        "w3": w3.astype(jnp.bfloat16),   # narrow (hidden, output_dim) — no pad
        "b3": b3,
    }


if __name__ == "__main__":
    # Small shapes consistent with the module: (batch, input_dim) -> (batch, 6)
    # batch chosen NOT divisible by 8 or the tile to exercise masked boundary
    # blocks; with tm_cap small enough the grid has 2 steps (megacore path).
    batch, input_dim, hidden_dim, output_dim = 500, 256, 128, 6

    key = jax.random.PRNGKey(0)
    kx, kp = jax.random.split(key)
    x = jax.random.normal(kx, (batch, input_dim), jnp.float32)
    params = init_params(kp, input_dim, hidden_dim, output_dim)

    out = ec_predictor_forward(x, params, tm_cap=2048)
    out = jax.block_until_ready(out)

    # Sanity checks mirroring assert_no_nan + expected shape after .squeeze().
    assert out.shape == (batch, output_dim), out.shape
    assert not bool(jnp.isnan(out).any()), "NaN detected in kernel output"

    # Numerical check against a pure-JAX reference on the same dtype path.
    ref = jax.block_until_ready(ec_predictor_reference(x, params))
    assert bool(jnp.allclose(out, ref, rtol=2e-3, atol=2e-3)), (
        float(jnp.max(jnp.abs(out - ref))))

    print("KERNEL_OK")
</pallas_src>

<mosaic_0001>
module attributes {stable_mosaic.version = 11 : i64} {
  func.func @ec_predictor_kernel(%arg0: i32, %arg1: memref<256x256xf32, #tpu.memory_space<vmem>>, %arg2: memref<256x128xbf16, #tpu.memory_space<vmem>>, %arg3: memref<1x128xf32, #tpu.memory_space<vmem>>, %arg4: memref<128x128xbf16, #tpu.memory_space<vmem>>, %arg5: memref<1x128xf32, #tpu.memory_space<vmem>>, %arg6: memref<128x6xbf16, #tpu.memory_space<vmem>>, %arg7: memref<1x6xf32, #tpu.memory_space<vmem>>, %arg8: memref<256x6xf32, #tpu.memory_space<vmem>>) attributes {dimension_semantics = [#tpu.dimension_semantics<parallel>], iteration_bounds = array<i64: 2>, scalar_prefetch = 0 : i64, scratch_operands = 0 : i64, tpu.core_type = #tpu.core_type<tc>, window_params = [{transform_indices = @transform_0, window_bounds = array<i64: 256, 256>}, {pipeline_mode = #tpu.pipeline_mode<synchronous>, transform_indices = @transform_1, window_bounds = array<i64: 256, 128>}, {pipeline_mode = #tpu.pipeline_mode<synchronous>, transform_indices = @transform_2, window_bounds = array<i64: 1, 128>}, {pipeline_mode = #tpu.pipeline_mode<synchronous>, transform_indices = @transform_3, window_bounds = array<i64: 128, 128>}, {pipeline_mode = #tpu.pipeline_mode<synchronous>, transform_indices = @transform_4, window_bounds = array<i64: 1, 128>}, {pipeline_mode = #tpu.pipeline_mode<synchronous>, transform_indices = @transform_5, window_bounds = array<i64: 128, 6>}, {pipeline_mode = #tpu.pipeline_mode<synchronous>, transform_indices = @transform_6, window_bounds = array<i64: 1, 6>}, {transform_indices = @transform_7, window_bounds = array<i64: 256, 6>}]} {
    %c0 = arith.constant 0 : index
    %c0_0 = arith.constant 0 : index
    %0 = vector.load %arg1[%c0, %c0_0] : memref<256x256xf32, #tpu.memory_space<vmem>>, vector<256x256xf32>
    %1 = arith.truncf %0 : vector<256x256xf32> to vector<256x256xbf16>
    %c0_1 = arith.constant 0 : index
    %c0_2 = arith.constant 0 : index
    %2 = vector.load %arg2[%c0_1, %c0_2] : memref<256x128xbf16, #tpu.memory_space<vmem>>, vector<256x128xbf16>
    %cst = arith.constant dense<0.000000e+00> : vector<256x128xf32>
    %3 = tpu.matmul %1, %2, %cst {dimension_numbers = #tpu.dot_dimension_numbers<[1], [0], [0], [1], [0, 0, 1, 1], [], []>} : vector<256x256xbf16>, vector<256x128xbf16>, vector<256x128xf32> -> vector<256x128xf32>
    %c0_3 = arith.constant 0 : index
    %c0_4 = arith.constant 0 : index
    %4 = vector.load %arg3[%c0_3, %c0_4] : memref<1x128xf32, #tpu.memory_space<vmem>>, vector<1x128xf32>
    %5 = vector.broadcast %4 : vector<1x128xf32> to vector<256x128xf32>
    %6 = arith.addf %3, %5 : vector<256x128xf32>
    %cst_5 = arith.constant 0.00999999977 : f32
    %7 = vector.broadcast %cst_5 : f32 to vector<256x128xf32>
    %8 = arith.mulf %7, %6 : vector<256x128xf32>
    %9 = arith.maximumf %6, %8 : vector<256x128xf32>
    %10 = arith.truncf %9 : vector<256x128xf32> to vector<256x128xbf16>
    %c0_6 = arith.constant 0 : index
    %c0_7 = arith.constant 0 : index
    %11 = vector.load %arg4[%c0_6, %c0_7] : memref<128x128xbf16, #tpu.memory_space<vmem>>, vector<128x128xbf16>
    %cst_8 = arith.constant dense<0.000000e+00> : vector<256x128xf32>
    %12 = tpu.matmul %10, %11, %cst_8 {dimension_numbers = #tpu.dot_dimension_numbers<[1], [0], [0], [1], [0, 0, 1, 1], [], []>} : vector<256x128xbf16>, vector<128x128xbf16>, vector<256x128xf32> -> vector<256x128xf32>
    %c0_9 = arith.constant 0 : index
    %c0_10 = arith.constant 0 : index
    %13 = vector.load %arg5[%c0_9, %c0_10] : memref<1x128xf32, #tpu.memory_space<vmem>>, vector<1x128xf32>
    %14 = vector.broadcast %13 : vector<1x128xf32> to vector<256x128xf32>
    %15 = arith.addf %12, %14 : vector<256x128xf32>
    %cst_11 = arith.constant 0.00999999977 : f32
    %16 = vector.broadcast %cst_11 : f32 to vector<256x128xf32>
    %17 = arith.mulf %16, %15 : vector<256x128xf32>
    %18 = arith.maximumf %15, %17 : vector<256x128xf32>
    %19 = arith.truncf %18 : vector<256x128xf32> to vector<256x128xbf16>
    %c0_12 = arith.constant 0 : index
    %c0_13 = arith.constant 0 : index
    %20 = vector.load %arg6[%c0_12, %c0_13] : memref<128x6xbf16, #tpu.memory_space<vmem>>, vector<128x6xbf16>
    %cst_14 = arith.constant dense<0.000000e+00> : vector<256x6xf32>
    %21 = tpu.matmul %19, %20, %cst_14 {dimension_numbers = #tpu.dot_dimension_numbers<[1], [0], [0], [1], [0, 0, 1, 1], [], []>} : vector<256x128xbf16>, vector<128x6xbf16>, vector<256x6xf32> -> vector<256x6xf32>
    %c0_15 = arith.constant 0 : index
    %c0_16 = arith.constant 0 : index
    %22 = vector.load %arg7[%c0_15, %c0_16] : memref<1x6xf32, #tpu.memory_space<vmem>>, vector<1x6xf32>
    %23 = vector.broadcast %22 : vector<1x6xf32> to vector<256x6xf32>
    %24 = arith.addf %21, %23 : vector<256x6xf32>
    %c0_17 = arith.constant 0 : index
    %c0_18 = arith.constant 0 : index
    %25 = vector.load %arg8[%c0_17, %c0_18] : memref<256x6xf32, #tpu.memory_space<vmem>>, vector<256x6xf32>
    tpu.vector_store %arg8[%c0_17, %c0_18], %24 {strides = array<i32>} : memref<256x6xf32, #tpu.memory_space<vmem>>, vector<256x6xf32>,
    return
  }
  func.func @transform_0(%arg0: i32) -> (i32, i32) {
    %c0_i32 = arith.constant 0 : i32
    %c0_i32_0 = arith.constant 0 : i32
    return %arg0, %c0_i32 : i32, i32
  }
  func.func @transform_1(%arg0: i32) -> (i32, i32) {
    %c0_i32 = arith.constant 0 : i32
    %c0_i32_0 = arith.constant 0 : i32
    %c0_i32_1 = arith.constant 0 : i32
    return %c0_i32, %c0_i32_0 : i32, i32
  }
  func.func @transform_2(%arg0: i32) -> (i32, i32) {
    %c0_i32 = arith.constant 0 : i32
    %c0_i32_0 = arith.constant 0 : i32
    %c0_i32_1 = arith.constant 0 : i32
    return %c0_i32, %c0_i32_0 : i32, i32
  }
  func.func @transform_3(%arg0: i32) -> (i32, i32) {
    %c0_i32 = arith.constant 0 : i32
    %c0_i32_0 = arith.constant 0 : i32
    %c0_i32_1 = arith.constant 0 : i32
    return %c0_i32, %c0_i32_0 : i32, i32
  }
  func.func @transform_4(%arg0: i32) -> (i32, i32) {
    %c0_i32 = arith.constant 0 : i32
    %c0_i32_0 = arith.constant 0 : i32
    %c0_i32_1 = arith.constant 0 : i32
    return %c0_i32, %c0_i32_0 : i32, i32
  }
  func.func @transform_5(%arg0: i32) -> (i32, i32) {
    %c0_i32 = arith.constant 0 : i32
    %c0_i32_0 = arith.constant 0 : i32
    %c0_i32_1 = arith.constant 0 : i32
    return %c0_i32, %c0_i32_0 : i32, i32
  }
  func.func @transform_6(%arg0: i32) -> (i32, i32) {
    %c0_i32 = arith.constant 0 : i32
    %c0_i32_0 = arith.constant 0 : i32
    %c0_i32_1 = arith.constant 0 : i32
    return %c0_i32, %c0_i32_0 : i32, i32
  }
  func.func @transform_7(%arg0: i32) -> (i32, i32) {
    %c0_i32 = arith.constant 0 : i32
    %c0_i32_0 = arith.constant 0 : i32
    return %arg0, %c0_i32 : i32, i32
  }
}

</mosaic_0001>

<llo_original>
// kernel: ec_predictor_forward.1
$region0: #{ec_predictor_forward.1}
  #allocation0 [shape = 'u32[]', space=smem, size = 0x4, offset = 0x4, fixed_abs, tag = 'smem constant byte address 0x4 - core index']
  #allocation1 [shape = 'u32[72,128]{1,0:T(1,128)}', space=vmem, size = 0x9000, scoped, tag = 'internal scratch']
  %s0 = inlined_call_operand.hbm [shape: f32[500,256], index: 0, kind: input, shape index: {}]
  %s1 = inlined_call_operand.hbm [shape: bf16[256,128], index: 1, kind: input, shape index: {}]
  %s2 = inlined_call_operand.vmem [shape: f32[1,128], index: 2, kind: input, shape index: {}]
  %s3 = inlined_call_operand.vmem [shape: bf16[128,128], index: 3, kind: input, shape index: {}]
  %s4 = inlined_call_operand.vmem [shape: f32[1,128], index: 4, kind: input, shape index: {}]
  %s5 = inlined_call_operand.vmem [shape: bf16[128,6], index: 5, kind: input, shape index: {}]
  %s6 = inlined_call_operand.vmem [shape: f32[1,6], index: 6, kind: input, shape index: {}]
  %s7 = inlined_call_operand.vmem [shape: f32[500,6], index: 7, kind: output, shape index: {}]
  %s8 = sld [smem:[#allocation0]]
  $region117: #{ec_predictor_forward.1} parent=0
    _
  %s10 = ssub.s32 1, %s8
  %s11 = scalar_select 0, %s10, %s8
  $region1: #{ec_predictor_forward.1} parent=0
    #allocation2 [shape = 'u8[524288]{0}', space=vmem, size = 0x80000, scoped, tag = 'input window, operand 0']
    #allocation3 [shape = 's32[2]{0}', space=sflag, size = 0x8, scoped, tag = 'scoped memory for ec_predictor_forward.1']
    #allocation4 [shape = 'u8[65536]{0}', space=vmem, size = 0x10000, scoped, tag = 'input window, operand 1, single buffered']
    #allocation5 [shape = 's32[1]{0}', space=sflag, size = 0x4, scoped, tag = 'scoped memory for ec_predictor_forward.1']
    #allocation6 [shape = 'u8[262144]{0}', space=vmem, size = 0x40000, scoped, tag = 'output window, operand 0']
    %12 = vsyncpa [#allocation3], 0
    %s13 = scalar_lea.sflag [#allocation3], 1
    %14 = vsyncpa %s13, 0
    %15 = vsyncpa [#allocation5], 0
    loop: start=0, step=1, limit=4
    $region2: #{ec_predictor_forward.1} parent=1 // loop_pre_header
      _
    $region3: #{ec_predictor_forward.1} parent=1 // loop_header
      %s17 = sphi 0, %s21
      %p18 = scmp.ge.s32.totalorder %s17, 4
      %s27 = sphi 0, %s29
      %s30 = sphi 0, %s27
      %s31 = sphi 0, %s30
      %s47 = sphi 0, %s31
      %s51 = sphi 0, %s51
      %s53 = sphi 0, %s51
      %s54 = sphi 0, %s53
      %s68 = sphi 0, %s54
      %s72 = sphi 0, %s72
      %s74 = sphi 0, %s72
      %s75 = sphi 0, %s74
      %s89 = sphi 0, %s75
      %s93 = sphi 0, %s93
      %s95 = sphi 0, %s93
      %s96 = sphi 0, %s95
      %s110 = sphi 0, %s96
      %s114 = sphi 0, %s114
      %s116 = sphi 0, %s114
      %s117 = sphi 0, %s116
      %s131 = sphi 0, %s117
      %s135 = sphi 0, %s135
      %s137 = sphi 0, %s135
      %s138 = sphi 0, %s137
      %s152 = sphi 0, %s138
      %s156 = sphi 0, %s156
      %s158 = sphi 0, %s156
      %s159 = sphi 0, %s158
      %s173 = sphi 0, %s159
      %s179 = sphi 0, %s181
      %s182 = sphi 0, %s179
      %s183 = sphi 0, %s182
      %s199 = sphi 0, %s183
    $region4: #{ec_predictor_forward.1} parent=1 // loop_header_branch
      %20 = sbr.rel (%p18) target = $region8
    $region5: #{ec_predictor_forward.1} parent=1 // loop_body
      %s22 = ssub.s32 %s17, 1
      %s23 = ssub.s32 %s17, 2
      %s24 = sadd.s32 %s17, 1
      %s25 = ssub.s32 %s17, %s24
      %p26 = scmp.eq.s32.totalorder %s25, 0
      %s28 = sadd.s32 %s27, 1
      %s29 = scalar_select %p26, %s27, %s28
      %p32 = pneg %p26
      %p33 = scmp.eq.s32.totalorder %s17, 1
      %p34 = por %p32, %p33
      %p35 = scmp.ne.s32.totalorder %s27, %s30
      %p36 = scmp.eq.s32.totalorder %s17, 0
      %p37 = por %p35, %p36
      %p38 = scmp.ne.s32.totalorder %s27, %s30
      %p39 = scmp.eq.s32.totalorder %s22, 1
      %p40 = por %p38, %p39
      %p41 = scmp.ne.s32.totalorder %s30, %s31
      %p42 = scmp.eq.s32.totalorder %s22, 0
      %p43 = por %p41, %p42
      %p44 = scmp.ne.s32.totalorder %s30, %s31
      %p45 = scmp.eq.s32.totalorder %s23, 1
      %p46 = por %p44, %p45
      %p48 = scmp.ne.s32.totalorder %s31, %s47
      %p49 = scmp.eq.s32.totalorder %s23, 0
      %p50 = por %p48, %p49
      %s52 = sadd.s32 %s51, 1
      %p55 = scmp.eq.s32.totalorder %s17, 1
      %p56 = scmp.ne.s32.totalorder %s51, %s53
      %p57 = scmp.eq.s32.totalorder %s17, 0
      %p58 = por %p56, %p57
      %p59 = scmp.ne.s32.totalorder %s51, %s53
      %p60 = scmp.eq.s32.totalorder %s22, 1
      %p61 = por %p59, %p60
      %p62 = scmp.ne.s32.totalorder %s53, %s54
      %p63 = scmp.eq.s32.totalorder %s22, 0
      %p64 = por %p62, %p63
      %p65 = scmp.ne.s32.totalorder %s53, %s54
      %p66 = scmp.eq.s32.totalorder %s23, 1
      %p67 = por %p65, %p66
      %p69 = scmp.ne.s32.totalorder %s54, %s68
      %p70 = scmp.eq.s32.totalorder %s23, 0
      %p71 = por %p69, %p70
      %s73 = sadd.s32 %s72, 1
      %p76 = scmp.eq.s32.totalorder %s17, 1
      %p77 = scmp.ne.s32.totalorder %s72, %s74
      %p78 = scmp.eq.s32.totalorder %s17, 0
      %p79 = por %p77, %p78
      %p80 = scmp.ne.s32.totalorder %s72, %s74
      %p81 = scmp.eq.s32.totalorder %s22, 1
      %p82 = por %p80, %p81
      %p83 = scmp.ne.s32.totalorder %s74, %s75
      %p84 = scmp.eq.s32.totalorder %s22, 0
      %p85 = por %p83, %p84
      %p86 = scmp.ne.s32.totalorder %s74, %s75
      %p87 = scmp.eq.s32.totalorder %s23, 1
      %p88 = por %p86, %p87
      %p90 = scmp.ne.s32.totalorder %s75, %s89
      %p91 = scmp.eq.s32.totalorder %s23, 0
      %p92 = por %p90, %p91
      %s94 = sadd.s32 %s93, 1
      %p97 = scmp.eq.s32.totalorder %s17, 1
      %p98 = scmp.ne.s32.totalorder %s93, %s95
      %p99 = scmp.eq.s32.totalorder %s17, 0
      %p100 = por %p98, %p99
      %p101 = scmp.ne.s32.totalorder %s93, %s95
      %p102 = scmp.eq.s32.totalorder %s22, 1
      %p103 = por %p101, %p102
      %p104 = scmp.ne.s32.totalorder %s95, %s96
      %p105 = scmp.eq.s32.totalorder %s22, 0
      %p106 = por %p104, %p105
      %p107 = scmp.ne.s32.totalorder %s95, %s96
      %p108 = scmp.eq.s32.totalorder %s23, 1
      %p109 = por %p107, %p108
      %p111 = scmp.ne.s32.totalorder %s96, %s110
      %p112 = scmp.eq.s32.totalorder %s23, 0
      %p113 = por %p111, %p112
      %s115 = sadd.s32 %s114, 1
      %p118 = scmp.eq.s32.totalorder %s17, 1
      %p119 = scmp.ne.s32.totalorder %s114, %s116
      %p120 = scmp.eq.s32.totalorder %s17, 0
      %p121 = por %p119, %p120
      %p122 = scmp.ne.s32.totalorder %s114, %s116
      %p123 = scmp.eq.s32.totalorder %s22, 1
      %p124 = por %p122, %p123
      %p125 = scmp.ne.s32.totalorder %s116, %s117
      %p126 = scmp.eq.s32.totalorder %s22, 0
      %p127 = por %p125, %p126
      %p128 = scmp.ne.s32.totalorder %s116, %s117
      %p129 = scmp.eq.s32.totalorder %s23, 1
      %p130 = por %p128, %p129
      %p132 = scmp.ne.s32.totalorder %s117, %s131
      %p133 = scmp.eq.s32.totalorder %s23, 0
      %p134 = por %p132, %p133
      %s136 = sadd.s32 %s135, 1
      %p139 = scmp.eq.s32.totalorder %s17, 1
      %p140 = scmp.ne.s32.totalorder %s135, %s137
      %p141 = scmp.eq.s32.totalorder %s17, 0
      %p142 = por %p140, %p141
      %p143 = scmp.ne.s32.totalorder %s135, %s137
      %p144 = scmp.eq.s32.totalorder %s22, 1
      %p145 = por %p143, %p144
      %p146 = scmp.ne.s32.totalorder %s137, %s138
      %p147 = scmp.eq.s32.totalorder %s22, 0
      %p148 = por %p146, %p147
      %p149 = scmp.ne.s32.totalorder %s137, %s138
      %p150 = scmp.eq.s32.totalorder %s23, 1
      %p151 = por %p149, %p150
      %p153 = scmp.ne.s32.totalorder %s138, %s152
      %p154 = scmp.eq.s32.totalorder %s23, 0
      %p155 = por %p153, %p154
      %s157 = sadd.s32 %s156, 1
      %p160 = scmp.eq.s32.totalorder %s17, 1
      %p161 = scmp.ne.s32.totalorder %s156, %s158
      %p162 = scmp.eq.s32.totalorder %s17, 0
      %p163 = por %p161, %p162
      %p164 = scmp.ne.s32.totalorder %s156, %s158
      %p165 = scmp.eq.s32.totalorder %s22, 1
      %p166 = por %p164, %p165
      %p167 = scmp.ne.s32.totalorder %s158, %s159
      %p168 = scmp.eq.s32.totalorder %s22, 0
      %p169 = por %p167, %p168
      %p170 = scmp.ne.s32.totalorder %s158, %s159
      %p171 = scmp.eq.s32.totalorder %s23, 1
      %p172 = por %p170, %p171
      %p174 = scmp.ne.s32.totalorder %s159, %s173
      %p175 = scmp.eq.s32.totalorder %s23, 0
      %p176 = por %p174, %p175
      %s177 = ssub.s32 %s17, %s24
      %p178 = scmp.eq.s32.totalorder %s177, 0
      %s180 = sadd.s32 %s179, 1
      %s181 = scalar_select %p178, %s179, %s180
      %p184 = pneg %p178
      %p185 = scmp.eq.s32.totalorder %s17, 1
      %p186 = por %p184, %p185
      %p187 = scmp.ne.s32.totalorder %s179, %s182
      %p188 = scmp.eq.s32.totalorder %s17, 0
      %p189 = por %p187, %p188
      %p190 = scmp.ne.s32.totalorder %s179, %s182
      %p191 = scmp.eq.s32.totalorder %s22, 1
      %p192 = por %p190, %p191
      %p193 = scmp.ne.s32.totalorder %s182, %s183
      %p194 = scmp.eq.s32.totalorder %s22, 0
      %p195 = por %p193, %p194
      %p196 = scmp.ne.s32.totalorder %s182, %s183
      %p197 = scmp.eq.s32.totalorder %s23, 1
      %p198 = por %p196, %p197
      %p200 = scmp.ne.s32.totalorder %s183, %s199
      %p201 = scmp.eq.s32.totalorder %s23, 0
      %p202 = por %p200, %p201
      %p203 = scmp.le.s32.totalorder 1, %s17
      %p204 = scmp.lt.s32.totalorder %s17, 3
      %p205 = pnand %p203, %p204
      %p206 = pneg %p205
      // Predicated region
      $region9: #{ec_predictor_forward.1} parent=5 // pred_check
        _
      $region10: #{ec_predictor_forward.1} parent=5 // pred_check_branch
        %208 = sbr.rel (%p205) target = $region12
      $region11: #{ec_predictor_forward.1} parent=5 // pred_region
        %s209 = ssub.s32 %s17, 1
        // Predicated region
        $region13: #{ec_predictor_forward.1} parent=11 // pred_check
          %p210 = pneg %p64
        $region14: #{ec_predictor_forward.1} parent=11 // pred_check_branch
          %212 = sbr.rel (%p210) target = $region16
        $region15: #{ec_predictor_forward.1} parent=11 // pred_region
          %214 = vsyncadd [#allocation5], 0
          %s215 = sshll.u32 %s1, 4
          %s216 = int_to_ptr.hbm [resolvable:$true] %s215
          %s217 = sshll.u32 [#allocation4], 4
          %s218 = int_to_ptr.vmem [resolvable:$true] %s217
          %223 = dma.hbm_to_vmem [thread:$0]  %s216, 2048, %s218, [#allocation5], 64, 64, 4
        $region16: #{ec_predictor_forward.1} parent=11 // pred_fallthru
          _
        // Predicated region
        $region17: #{ec_predictor_forward.1} parent=11 // pred_check
          %p224 = pneg %p85
        $region18: #{ec_predictor_forward.1} parent=11 // pred_check_branch
          %226 = sbr.rel (%p224) target = $region20
        $region19: #{ec_predictor_forward.1} parent=11 // pred_region
          _
        $region20: #{ec_predictor_forward.1} parent=11 // pred_fallthru
          _
        // Predicated region
        $region21: #{ec_predictor_forward.1} parent=11 // pred_check
          %p227 = pneg %p106
        $region22: #{ec_predictor_forward.1} parent=11 // pred_check_branch
          %229 = sbr.rel (%p227) target = $region24
        $region23: #{ec_predictor_forward.1} parent=11 // pred_region
          _
        $region24: #{ec_predictor_forward.1} parent=11 // pred_fallthru
          _
        // Predicated region
        $region25: #{ec_predictor_forward.1} parent=11 // pred_check
          %p230 = pneg %p127
        $region26: #{ec_predictor_forward.1} parent=11 // pred_check_branch
          %232 = sbr.rel (%p230) target = $region28
        $region27: #{ec_predictor_forward.1} parent=11 // pred_region
          _
        $region28: #{ec_predictor_forward.1} parent=11 // pred_fallthru
          _
        // Predicated region
        $region29: #{ec_predictor_forward.1} parent=11 // pred_check
          %p233 = pneg %p148
        $region30: #{ec_predictor_forward.1} parent=11 // pred_check_branch
          %235 = sbr.rel (%p233) target = $region32
        $region31: #{ec_predictor_forward.1} parent=11 // pred_region
          _
        $region32: #{ec_predictor_forward.1} parent=11 // pred_fallthru
          _
        // Predicated region
        $region33: #{ec_predictor_forward.1} parent=11 // pred_check
          %p236 = pneg %p169
        $region34: #{ec_predictor_forward.1} parent=11 // pred_check_branch
          %238 = sbr.rel (%p236) target = $region36
        $region35: #{ec_predictor_forward.1} parent=11 // pred_region
          _
        $region36: #{ec_predictor_forward.1} parent=11 // pred_fallthru
          _
      $region12: #{ec_predictor_forward.1} parent=5 // pred_fallthru
        _
      %p239 = scmp.lt.s32.totalorder %s17, 2
      // Predicated region
      $region37: #{ec_predictor_forward.1} parent=5 // pred_check
        %p240 = pneg %p239
      $region38: #{ec_predictor_forward.1} parent=5 // pred_check_branch
        %242 = sbr.rel (%p240) target = $region40
      $region39: #{ec_predictor_forward.1} parent=5 // pred_region
        // Predicated region
        $region41: #{ec_predictor_forward.1} parent=39 // pred_check
          %p243 = pneg %p37
        $region42: #{ec_predictor_forward.1} parent=39 // pred_check_branch
          %245 = sbr.rel (%p243) target = $region44
        $region43: #{ec_predictor_forward.1} parent=39 // pred_region
          %s246 = sand.u32 %s27, 1
          %s247 = scalar_lea.sflag [#allocation3], %s246
          %s248 = sand.u32 %s27, 1
          %s249 = smul.addr %s248, 512
          %s250 = scalar_lea.vmem [#allocation2], %s249
          %s251 = smul.u32 32, %s17
          %s252 = ssub.s32 63, %s251
          %p253 = scmp.lt.s32.totalorder %s252, 32
          %s254 = scalar_select %p253, %s252, 32
          %s255 = smul.u32 8, %s254
          %s256 = smul.u32 %s255, 2
          %s257 = ssub.s32 512, %s256
          %s258 = sshll.u32 %s257, 4
          %259 = vsyncadd %s247, %s258
          %p260 = scmp.ne.s32.totalorder 0, %s256
          %s261 = smul.addr %s251, 2
          %s262 = smul.addr %s261, 8
          %s263 = scalar_lea.hbm %s0, %s262
          %s264 = smul.u32 16, %s254
          %s265 = sshll.u32 %s263, 4
          %s266 = int_to_ptr.hbm [resolvable:$true] %s265
          %s267 = sshll.u32 %s250, 4
          %s268 = int_to_ptr.vmem [resolvable:$true] %s267
          %s269 = sshll.u32 %s264, 4
          %273 = dma.hbm_to_vmem [thread:$0]  (%p260), %s266, %s269, %s268, %s247, 256, 256, 16
        $region44: #{ec_predictor_forward.1} parent=39 // pred_fallthru
          _
      $region40: #{ec_predictor_forward.1} parent=5 // pred_fallthru
        _
      %p274 = scmp.le.s32.totalorder 1, %s17
      %p275 = scmp.lt.s32.totalorder %s17, 3
      %p276 = pnand %p274, %p275
      %p277 = pneg %p276
      // Predicated region
      $region45: #{ec_predictor_forward.1} parent=5 // pred_check
        _
      $region46: #{ec_predictor_forward.1} parent=5 // pred_check_branch
        %279 = sbr.rel (%p276) target = $region48
      $region47: #{ec_predictor_forward.1} parent=5 // pred_region
        %s280 = ssub.s32 %s17, 1
        %s281 = sand.u32 %s30, 1
        %s282 = scalar_lea.sflag [#allocation3], %s281
        %s283 = sand.u32 %s30, 1
        %s284 = smul.addr %s283, 512
        %s285 = scalar_lea.vmem [#allocation2], %s284
        // Predicated region
        $region49: #{ec_predictor_forward.1} parent=47 // pred_check
          %p286 = pneg %p43
        $region50: #{ec_predictor_forward.1} parent=47 // pred_check_branch
          %288 = sbr.rel (%p286) target = $region52
        $region51: #{ec_predictor_forward.1} parent=47 // pred_region
          %290 = dma.done %s282, 8192
        $region52: #{ec_predictor_forward.1} parent=47 // pred_fallthru
          _
        // Predicated region
        $region53: #{ec_predictor_forward.1} parent=47 // pred_check
          %p291 = pneg %p64
        $region54: #{ec_predictor_forward.1} parent=47 // pred_check_branch
          %293 = sbr.rel (%p291) target = $region56
        $region55: #{ec_predictor_forward.1} parent=47 // pred_region
          %295 = dma.done [#allocation5], 2048
        $region56: #{ec_predictor_forward.1} parent=47 // pred_fallthru
          _
        %s296 = sand.u32 %s30, 1
        %s297 = scalar_lea.sflag [#allocation3], %s296
        %s298 = sand.u32 %s30, 1
        %s299 = smul.addr %s298, 512
        %s300 = scalar_lea.vmem [#allocation2], %s299
        %p301 = pneg %p43
        %p302 = pneg %p40
        %p303 = pneg %p64
        %p304 = pneg %p61
        %p305 = pneg %p85
        %p306 = pneg %p82
        %p307 = pneg %p106
        %p308 = pneg %p103
        %p309 = pneg %p127
        %p310 = pneg %p124
        %p311 = pneg %p148
        %p312 = pneg %p145
        %p313 = pneg %p169
        %p314 = pneg %p166
        %p315 = pneg %p195
        %p316 = pneg %p192
        %s317 = sand.u32 %s182, 1
        %s318 = sand.u32 %s182, 1
        %s319 = smul.addr %s318, 256
        %s320 = scalar_lea.vmem [#allocation6], %s319
        %s321 = smul.u32 32, %s22
        %s322 = ssub.s32 63, %s321
        %p323 = scmp.lt.s32.totalorder %s322, 32
        %s324 = scalar_select %p323, %s322, 32
        %s325 = smul.u32 8, %s324
        %s326 = smul.u32 %s325, 2
        %s327 = smul.u32 32, %s22
        %s328 = ssub.s32 63, %s327
        %p329 = scmp.lt.s32.totalorder %s328, 32
        %s330 = scalar_select %p329, %s328, 32
        %s331 = smul.u32 8, %s330
        %v332 = vld [vmem:[%s285] sm:$0xff]
        %v333 = vld [vmem:[%s285 + $0x8] sm:$0xff]
        %v334 = vld [vmem:[%s285 + $0x10] sm:$0xff]
        %v335 = vld [vmem:[%s285 + $0x18] sm:$0xff]
        %v336 = vld [vmem:[%s285 + $0x20] sm:$0xff]
        %v337 = vld [vmem:[%s285 + $0x28] sm:$0xff]
        %v338 = vld [vmem:[%s285 + $0x30] sm:$0xff]
        %v339 = vld [vmem:[%s285 + $0x38] sm:$0xff]
        %v340 = vld [vmem:[%s285 + $0x40] sm:$0xff]
        %v341 = vld [vmem:[%s285 + $0x48] sm:$0xff]
        %v342 = vld [vmem:[%s285 + $0x50] sm:$0xff]
        %v343 = vld [vmem:[%s285 + $0x58] sm:$0xff]
        %v344 = vld [vmem:[%s285 + $0x60] sm:$0xff]
        %v345 = vld [vmem:[%s285 + $0x68] sm:$0xff]
        %v346 = vld [vmem:[%s285 + $0x70] sm:$0xff]
        %v347 = vld [vmem:[%s285 + $0x78] sm:$0xff]
        %v348 = vld [vmem:[%s285 + $0x80] sm:$0xff]
        %v349 = vld [vmem:[%s285 + $0x88] sm:$0xff]
        %v350 = vld [vmem:[%s285 + $0x90] sm:$0xff]
        %v351 = vld [vmem:[%s285 + $0x98] sm:$0xff]
        %v352 = vld [vmem:[%s285 + $0xa0] sm:$0xff]
        %v353 = vld [vmem:[%s285 + $0xa8] sm:$0xff]
        %v354 = vld [vmem:[%s285 + $0xb0] sm:$0xff]
        %v355 = vld [vmem:[%s285 + $0xb8] sm:$0xff]
        %v356 = vld [vmem:[%s285 + $0xc0] sm:$0xff]
        %v357 = vld [vmem:[%s285 + $0xc8] sm:$0xff]
        %v358 = vld [vmem:[%s285 + $0xd0] sm:$0xff]
        %v359 = vld [vmem:[%s285 + $0xd8] sm:$0xff]
        %v360 = vld [vmem:[%s285 + $0xe0] sm:$0xff]
        %v361 = vld [vmem:[%s285 + $0xe8] sm:$0xff]
        %v362 = vld [vmem:[%s285 + $0xf0] sm:$0xff]
        %v363 = vld [vmem:[%s285 + $0xf8] sm:$0xff]
        %v364 = vld [vmem:[%s285 + $0x100] sm:$0xff]
        %v365 = vld [vmem:[%s285 + $0x108] sm:$0xff]
        %v366 = vld [vmem:[%s285 + $0x110] sm:$0xff]
        %v367 = vld [vmem:[%s285 + $0x118] sm:$0xff]
        %v368 = vld [vmem:[%s285 + $0x120] sm:$0xff]
        %v369 = vld [vmem:[%s285 + $0x128] sm:$0xff]
        %v370 = vld [vmem:[%s285 + $0x130] sm:$0xff]
        %v371 = vld [vmem:[%s285 + $0x138] sm:$0xff]
        %v372 = vld [vmem:[%s285 + $0x140] sm:$0xff]
        %v373 = vld [vmem:[%s285 + $0x148] sm:$0xff]
        %v374 = vld [vmem:[%s285 + $0x150] sm:$0xff]
        %v375 = vld [vmem:[%s285 + $0x158] sm:$0xff]
        %v376 = vld [vmem:[%s285 + $0x160] sm:$0xff]
        %v377 = vld [vmem:[%s285 + $0x168] sm:$0xff]
        %v378 = vld [vmem:[%s285 + $0x170] sm:$0xff]
        %v379 = vld [vmem:[%s285 + $0x178] sm:$0xff]
        %v380 = vld [vmem:[%s285 + $0x180] sm:$0xff]
        %v381 = vld [vmem:[%s285 + $0x188] sm:$0xff]
        %v382 = vld [vmem:[%s285 + $0x190] sm:$0xff]
        %v383 = vld [vmem:[%s285 + $0x198] sm:$0xff]
        %v384 = vld [vmem:[%s285 + $0x1a0] sm:$0xff]
        %v385 = vld [vmem:[%s285 + $0x1a8] sm:$0xff]
        %v386 = vld [vmem:[%s285 + $0x1b0] sm:$0xff]
        %v387 = vld [vmem:[%s285 + $0x1b8] sm:$0xff]
        %v388 = vld [vmem:[%s285 + $0x1c0] sm:$0xff]
        %v389 = vld [vmem:[%s285 + $0x1c8] sm:$0xff]
        %v390 = vld [vmem:[%s285 + $0x1d0] sm:$0xff]
        %v391 = vld [vmem:[%s285 + $0x1d8] sm:$0xff]
        %v392 = vld [vmem:[%s285 + $0x1e0] sm:$0xff]
        %v393 = vld [vmem:[%s285 + $0x1e8] sm:$0xff]
        %v394 = vld [vmem:[%s285 + $0x1f0] sm:$0xff]
        %v395 = vld [vmem:[%s285 + $0x1f8] sm:$0xff]
        %v396 = vpack.c.bf16 %v334, %v332
        %v397 = vpack.c.bf16 %v335, %v333
        %v398 = vpack.c.bf16 %v338, %v336
        %v399 = vpack.c.bf16 %v339, %v337
        %v400 = vpack.c.bf16 %v342, %v340
        %v401 = vpack.c.bf16 %v343, %v341
        %v402 = vpack.c.bf16 %v346, %v344
        %v403 = vpack.c.bf16 %v347, %v345
        %v404 = vpack.c.bf16 %v350, %v348
        %v405 = vpack.c.bf16 %v351, %v349
        %v406 = vpack.c.bf16 %v354, %v352
        %v407 = vpack.c.bf16 %v355, %v353
        %v408 = vpack.c.bf16 %v358, %v356
        %v409 = vpack.c.bf16 %v359, %v357
        %v410 = vpack.c.bf16 %v362, %v360
        %v411 = vpack.c.bf16 %v363, %v361
        %v412 = vpack.c.bf16 %v366, %v364
        %v413 = vpack.c.bf16 %v367, %v365
        %v414 = vpack.c.bf16 %v370, %v368
        %v415 = vpack.c.bf16 %v371, %v369
        %v416 = vpack.c.bf16 %v374, %v372
        %v417 = vpack.c.bf16 %v375, %v373
        %v418 = vpack.c.bf16 %v378, %v376
        %v419 = vpack.c.bf16 %v379, %v377
        %v420 = vpack.c.bf16 %v382, %v380
        %v421 = vpack.c.bf16 %v383, %v381
        %v422 = vpack.c.bf16 %v386, %v384
        %v423 = vpack.c.bf16 %v387, %v385
        %v424 = vpack.c.bf16 %v390, %v388
        %v425 = vpack.c.bf16 %v391, %v389
        %v426 = vpack.c.bf16 %v394, %v392
        %v427 = vpack.c.bf16 %v395, %v393
        %v428 = vld [vmem:[#allocation4] sm:$0xf]
        %v429 = vld [vmem:[#allocation4 + $0x4] sm:$0xf]
        %v430 = vld [vmem:[#allocation4 + $0x8] sm:$0xf]
        %v431 = vld [vmem:[#allocation4 + $0xc] sm:$0xf]
        %v432 = vld [vmem:[#allocation4 + $0x10] sm:$0xf]
        %v433 = vld [vmem:[#allocation4 + $0x14] sm:$0xf]
        %v434 = vld [vmem:[#allocation4 + $0x18] sm:$0xf]
        %v435 = vld [vmem:[#allocation4 + $0x1c] sm:$0xf]
        %v436 = vld [vmem:[#allocation4 + $0x20] sm:$0xf]
        %v437 = vld [vmem:[#allocation4 + $0x24] sm:$0xf]
        %v438 = vld [vmem:[#allocation4 + $0x28] sm:$0xf]
        %v439 = vld [vmem:[#allocation4 + $0x2c] sm:$0xf]
        %v440 = vld [vmem:[#allocation4 + $0x30] sm:$0xf]
        %v441 = vld [vmem:[#allocation4 + $0x34] sm:$0xf]
        %v442 = vld [vmem:[#allocation4 + $0x38] sm:$0xf]
        %v443 = vld [vmem:[#allocation4 + $0x3c] sm:$0xf]
        %v444 = vld [vmem:[#allocation4 + $0x40] sm:$0xf]
        %v445 = vld [vmem:[#allocation4 + $0x44] sm:$0xf]
        %v446 = vld [vmem:[#allocation4 + $0x48] sm:$0xf]
        %v447 = vld [vmem:[#allocation4 + $0x4c] sm:$0xf]
        %v448 = vld [vmem:[#allocation4 + $0x50] sm:$0xf]
        %v449 = vld [vmem:[#allocation4 + $0x54] sm:$0xf]
        %v450 = vld [vmem:[#allocation4 + $0x58] sm:$0xf]
        %v451 = vld [vmem:[#allocation4 + $0x5c] sm:$0xf]
        %v452 = vld [vmem:[#allocation4 + $0x60] sm:$0xf]
        %v453 = vld [vmem:[#allocation4 + $0x64] sm:$0xf]
        %v454 = vld [vmem:[#allocation4 + $0x68] sm:$0xf]
        %v455 = vld [vmem:[#allocation4 + $0x6c] sm:$0xf]
        %v456 = vld [vmem:[#allocation4 + $0x70] sm:$0xf]
        %v457 = vld [vmem:[#allocation4 + $0x74] sm:$0xf]
        %v458 = vld [vmem:[#allocation4 + $0x78] sm:$0xf]
        %v459 = vld [vmem:[#allocation4 + $0x7c] sm:$0xf]
        %v460 = vld [vmem:[%s2] sm:$0x1]
        %v462 = vperm.slane %v460, 0
        %v496 = vunpack.c.l.b16 %v428
        %v497 = vunpack.c.l.b16 %v429
        %v498 = vunpack.c.l.b16 %v430
        %v499 = vunpack.c.l.b16 %v431
        %v500 = vunpack.c.l.b16 %v432
        %v501 = vunpack.c.l.b16 %v433
        %v502 = vunpack.c.l.b16 %v434
        %v503 = vunpack.c.l.b16 %v435
        %v504 = vunpack.c.l.b16 %v436
        %v505 = vunpack.c.l.b16 %v437
        %v506 = vunpack.c.l.b16 %v438
        %v507 = vunpack.c.l.b16 %v439
        %v508 = vunpack.c.l.b16 %v440
        %v509 = vunpack.c.l.b16 %v441
        %v510 = vunpack.c.l.b16 %v442
        %v511 = vunpack.c.l.b16 %v443
        %v512 = vunpack.c.l.b16 %v444
        %v513 = vunpack.c.l.b16 %v445
        %v514 = vunpack.c.l.b16 %v446
        %v515 = vunpack.c.l.b16 %v447
        %v516 = vunpack.c.l.b16 %v448
        %v517 = vunpack.c.l.b16 %v449
        %v518 = vunpack.c.l.b16 %v450
        %v519 = vunpack.c.l.b16 %v451
        %v520 = vunpack.c.l.b16 %v452
        %v521 = vunpack.c.l.b16 %v453
        %v522 = vunpack.c.l.b16 %v454
        %v523 = vunpack.c.l.b16 %v455
        %v524 = vunpack.c.l.b16 %v456
        %v525 = vunpack.c.l.b16 %v457
        %v526 = vunpack.c.l.b16 %v458
        %v527 = vunpack.c.l.b16 %v459
        %v528 = vpack.c.b16 %v497, %v496
        %v529 = vpack.c.b16 %v499, %v498
        %v530 = vpack.c.b16 %v501, %v500
        %v531 = vpack.c.b16 %v503, %v502
        %v532 = vpack.c.b16 %v505, %v504
        %v533 = vpack.c.b16 %v507, %v506
        %v534 = vpack.c.b16 %v509, %v508
        %v535 = vpack.c.b16 %v511, %v510
        %v536 = vpack.c.b16 %v513, %v512
        %v537 = vpack.c.b16 %v515, %v514
        %v538 = vpack.c.b16 %v517, %v516
        %v539 = vpack.c.b16 %v519, %v518
        %v540 = vpack.c.b16 %v521, %v520
        %v541 = vpack.c.b16 %v523, %v522
        %v542 = vpack.c.b16 %v525, %v524
        %v543 = vpack.c.b16 %v527, %v526
        %560 = vmatpush.bf16.msra.mxu0 %v535
        %561 = vmatpush.bf16.msra.mxu0 %v534
        %562 = vmatpush.bf16.msra.mxu0 %v533
        %563 = vmatpush.bf16.msra.mxu0 %v532
        %564 = vmatpush.bf16.msra.mxu0 %v531
        %565 = vmatpush.bf16.msra.mxu0 %v530
        %566 = vmatpush.bf16.msra.mxu0 %v529
        %567 = vmatpush.bf16.msra.mxu0 %v528
        %568 = vmatmul.bf16.gmra.mxu0 %v396
        %v569 = vpop.f32.mrf.mxu0
        %v570 = vadd.f32 %v462, %v569
        %v571 = vpop.f32.mrf.mxu0
        %v572 = vadd.f32 %v462, %v571
        %573 = vmatmul.bf16.gmra.mxu0 %v398
        %v574 = vpop.f32.mrf.mxu0
        %v575 = vadd.f32 %v462, %v574
        %v576 = vpop.f32.mrf.mxu0
        %v577 = vadd.f32 %v462, %v576
        %578 = vmatmul.bf16.gmra.mxu0 %v400
        %v579 = vpop.f32.mrf.mxu0
        %v580 = vadd.f32 %v462, %v579
        %v581 = vpop.f32.mrf.mxu0
        %v582 = vadd.f32 %v462, %v581
        %583 = vmatmul.bf16.gmra.mxu0 %v402
        %v584 = vpop.f32.mrf.mxu0
        %v585 = vadd.f32 %v462, %v584
        %v586 = vpop.f32.mrf.mxu0
        %v587 = vadd.f32 %v462, %v586
        %588 = vmatmul.bf16.gmra.mxu0 %v404
        %v589 = vpop.f32.mrf.mxu0
        %v590 = vadd.f32 %v462, %v589
        %v591 = vpop.f32.mrf.mxu0
        %v592 = vadd.f32 %v462, %v591
        %593 = vmatmul.bf16.gmra.mxu0 %v406
        %v594 = vpop.f32.mrf.mxu0
        %v595 = vadd.f32 %v462, %v594
        %v596 = vpop.f32.mrf.mxu0
        %v597 = vadd.f32 %v462, %v596
        %598 = vmatmul.bf16.gmra.mxu0 %v408
        %v599 = vpop.f32.mrf.mxu0
        %v600 = vadd.f32 %v462, %v599
        %v601 = vpop.f32.mrf.mxu0
        %v602 = vadd.f32 %v462, %v601
        %603 = vmatmul.bf16.gmra.mxu0 %v410
        %v604 = vpop.f32.mrf.mxu0
        %v605 = vadd.f32 %v462, %v604
        %v606 = vpop.f32.mrf.mxu0
        %v607 = vadd.f32 %v462, %v606
        %608 = vmatmul.bf16.gmra.mxu0 %v412
        %v609 = vpop.f32.mrf.mxu0
        %v610 = vadd.f32 %v462, %v609
        %v611 = vpop.f32.mrf.mxu0
        %v612 = vadd.f32 %v462, %v611
        %613 = vmatmul.bf16.gmra.mxu0 %v414
        %v614 = vpop.f32.mrf.mxu0
        %v615 = vadd.f32 %v462, %v614
        %v616 = vpop.f32.mrf.mxu0
        %v617 = vadd.f32 %v462, %v616
        %618 = vmatmul.bf16.gmra.mxu0 %v416
        %v619 = vpop.f32.mrf.mxu0
        %v620 = vadd.f32 %v462, %v619
        %v621 = vpop.f32.mrf.mxu0
        %v622 = vadd.f32 %v462, %v621
        %623 = vmatmul.bf16.gmra.mxu0 %v418
        %v624 = vpop.f32.mrf.mxu0
        %v625 = vadd.f32 %v462, %v624
        %v626 = vpop.f32.mrf.mxu0
        %v627 = vadd.f32 %v462, %v626
        %628 = vmatmul.bf16.gmra.mxu0 %v420
        %v629 = vpop.f32.mrf.mxu0
        %v630 = vadd.f32 %v462, %v629
        %v631 = vpop.f32.mrf.mxu0
        %v632 = vadd.f32 %v462, %v631
        %633 = vmatmul.bf16.gmra.mxu0 %v422
        %v634 = vpop.f32.mrf.mxu0
        %v635 = vadd.f32 %v462, %v634
        %v636 = vpop.f32.mrf.mxu0
        %v637 = vadd.f32 %v462, %v636
        %638 = vmatmul.bf16.gmra.mxu0 %v424
        %v639 = vpop.f32.mrf.mxu0
        %v640 = vadd.f32 %v462, %v639
        %v641 = vpop.f32.mrf.mxu0
        %v642 = vadd.f32 %v462, %v641
        %643 = vmatmul.bf16.gmra.mxu0 %v426
        %v644 = vpop.f32.mrf.mxu0
        %v645 = vadd.f32 %v462, %v644
        %v646 = vpop.f32.mrf.mxu0
        %v647 = vadd.f32 %v462, %v646
        %648 = vdwg.mxu0
        %649 = vmatpush.bf16.msra.mxu0 %v543
        %650 = vmatpush.bf16.msra.mxu0 %v542
        %651 = vmatpush.bf16.msra.mxu0 %v541
        %652 = vmatpush.bf16.msra.mxu0 %v540
        %653 = vmatpush.bf16.msra.mxu0 %v539
        %654 = vmatpush.bf16.msra.mxu0 %v538
        %655 = vmatpush.bf16.msra.mxu0 %v537
        %656 = vmatpush.bf16.msra.mxu0 %v536
        %657 = vmatmul.bf16.gmra.mxu0 %v397
        %v658 = vpop.f32.mrf.mxu0
        %v659 = vadd.f32 %v570, %v658
        %v660 = vpop.f32.mrf.mxu0
        %v661 = vadd.f32 %v572, %v660
        %662 = vmatmul.bf16.gmra.mxu0 %v399
        %v663 = vpop.f32.mrf.mxu0
        %v664 = vadd.f32 %v575, %v663
        %v665 = vpop.f32.mrf.mxu0
        %v666 = vadd.f32 %v577, %v665
        %667 = vmatmul.bf16.gmra.mxu0 %v401
        %v668 = vpop.f32.mrf.mxu0
        %v669 = vadd.f32 %v580, %v668
        %v670 = vpop.f32.mrf.mxu0
        %v671 = vadd.f32 %v582, %v670
        %672 = vmatmul.bf16.gmra.mxu0 %v403
        %v673 = vpop.f32.mrf.mxu0
        %v674 = vadd.f32 %v585, %v673
        %v675 = vpop.f32.mrf.mxu0
        %v676 = vadd.f32 %v587, %v675
        %677 = vmatmul.bf16.gmra.mxu0 %v405
        %v678 = vpop.f32.mrf.mxu0
        %v679 = vadd.f32 %v590, %v678
        %v680 = vpop.f32.mrf.mxu0
        %v681 = vadd.f32 %v592, %v680
        %682 = vmatmul.bf16.gmra.mxu0 %v407
        %v683 = vpop.f32.mrf.mxu0
        %v684 = vadd.f32 %v595, %v683
        %v685 = vpop.f32.mrf.mxu0
        %v686 = vadd.f32 %v597, %v685
        %687 = vmatmul.bf16.gmra.mxu0 %v409
        %v688 = vpop.f32.mrf.mxu0
        %v689 = vadd.f32 %v600, %v688
        %v690 = vpop.f32.mrf.mxu0
        %v691 = vadd.f32 %v602, %v690
        %692 = vmatmul.bf16.gmra.mxu0 %v411
        %v693 = vpop.f32.mrf.mxu0
        %v694 = vadd.f32 %v605, %v693
        %v695 = vpop.f32.mrf.mxu0
        %v696 = vadd.f32 %v607, %v695
        %697 = vmatmul.bf16.gmra.mxu0 %v413
        %v698 = vpop.f32.mrf.mxu0
        %v699 = vadd.f32 %v610, %v698
        %v700 = vpop.f32.mrf.mxu0
        %v701 = vadd.f32 %v612, %v700
        %702 = vmatmul.bf16.gmra.mxu0 %v415
        %v703 = vpop.f32.mrf.mxu0
        %v704 = vadd.f32 %v615, %v703
        %v705 = vpop.f32.mrf.mxu0
        %v706 = vadd.f32 %v617, %v705
        %707 = vmatmul.bf16.gmra.mxu0 %v417
        %v708 = vpop.f32.mrf.mxu0
        %v709 = vadd.f32 %v620, %v708
        %v710 = vpop.f32.mrf.mxu0
        %v711 = vadd.f32 %v622, %v710
        %712 = vmatmul.bf16.gmra.mxu0 %v419
        %v713 = vpop.f32.mrf.mxu0
        %v714 = vadd.f32 %v625, %v713
        %v715 = vpop.f32.mrf.mxu0
        %v716 = vadd.f32 %v627, %v715
        %717 = vmatmul.bf16.gmra.mxu0 %v421
        %v718 = vpop.f32.mrf.mxu0
        %v719 = vadd.f32 %v630, %v718
        %v720 = vpop.f32.mrf.mxu0
        %v721 = vadd.f32 %v632, %v720
        %722 = vmatmul.bf16.gmra.mxu0 %v423
        %v723 = vpop.f32.mrf.mxu0
        %v724 = vadd.f32 %v635, %v723
        %v725 = vpop.f32.mrf.mxu0
        %v726 = vadd.f32 %v637, %v725
        %727 = vmatmul.bf16.gmra.mxu0 %v425
        %v728 = vpop.f32.mrf.mxu0
        %v729 = vadd.f32 %v640, %v728
        %v730 = vpop.f32.mrf.mxu0
        %v731 = vadd.f32 %v642, %v730
        %732 = vmatmul.bf16.gmra.mxu0 %v427
        %v733 = vpop.f32.mrf.mxu0
        %v734 = vadd.f32 %v645, %v733
        %v735 = vpop.f32.mrf.mxu0
        %v736 = vadd.f32 %v647, %v735
        %737 = vdwg.mxu0
        %v738 = vmul.f32 %v659, 0.01
        %v739 = vmul.f32 %v661, 0.01
        %v740 = vmul.f32 %v664, 0.01
        %v741 = vmul.f32 %v666, 0.01
        %v742 = vmul.f32 %v669, 0.01
        %v743 = vmul.f32 %v671, 0.01
        %v744 = vmul.f32 %v674, 0.01
        %v745 = vmul.f32 %v676, 0.01
        %v746 = vmul.f32 %v679, 0.01
        %v747 = vmul.f32 %v681, 0.01
        %v748 = vmul.f32 %v684, 0.01
        %v749 = vmul.f32 %v686, 0.01
        %v750 = vmul.f32 %v689, 0.01
        %v751 = vmul.f32 %v691, 0.01
        %v752 = vmul.f32 %v694, 0.01
        %v753 = vmul.f32 %v696, 0.01
        %v754 = vmul.f32 %v699, 0.01
        %v755 = vmul.f32 %v701, 0.01
        %v756 = vmul.f32 %v704, 0.01
        %v757 = vmul.f32 %v706, 0.01
        %v758 = vmul.f32 %v709, 0.01
        %v759 = vmul.f32 %v711, 0.01
        %v760 = vmul.f32 %v714, 0.01
        %v761 = vmul.f32 %v716, 0.01
        %v762 = vmul.f32 %v719, 0.01
        %v763 = vmul.f32 %v721, 0.01
        %v764 = vmul.f32 %v724, 0.01
        %v765 = vmul.f32 %v726, 0.01
        %v766 = vmul.f32 %v729, 0.01
        %v767 = vmul.f32 %v731, 0.01
        %v768 = vmul.f32 %v734, 0.01
        %v769 = vmul.f32 %v736, 0.01
        %v770 = vmax.f32 %v659, %v738
        %v771 = vmax.f32 %v661, %v739
        %v772 = vmax.f32 %v664, %v740
        %v773 = vmax.f32 %v666, %v741
        %v774 = vmax.f32 %v669, %v742
        %v775 = vmax.f32 %v671, %v743
        %v776 = vmax.f32 %v674, %v744
        %v777 = vmax.f32 %v676, %v745
        %v778 = vmax.f32 %v679, %v746
        %v779 = vmax.f32 %v681, %v747
        %v780 = vmax.f32 %v684, %v748
        %v781 = vmax.f32 %v686, %v749
        %v782 = vmax.f32 %v689, %v750
        %v783 = vmax.f32 %v691, %v751
        %v784 = vmax.f32 %v694, %v752
        %v785 = vmax.f32 %v696, %v753
        %v786 = vmax.f32 %v699, %v754
        %v787 = vmax.f32 %v701, %v755
        %v788 = vmax.f32 %v704, %v756
        %v789 = vmax.f32 %v706, %v757
        %v790 = vmax.f32 %v709, %v758
        %v791 = vmax.f32 %v711, %v759
        %v792 = vmax.f32 %v714, %v760
        %v793 = vmax.f32 %v716, %v761
        %v794 = vmax.f32 %v719, %v762
        %v795 = vmax.f32 %v721, %v763
        %v796 = vmax.f32 %v724, %v764
        %v797 = vmax.f32 %v726, %v765
        %v798 = vmax.f32 %v729, %v766
        %v799 = vmax.f32 %v731, %v767
        %v800 = vmax.f32 %v734, %v768
        %v801 = vmax.f32 %v736, %v769
        %v802 = vpack.c.bf16 %v771, %v770
        %v803 = vpack.c.bf16 %v773, %v772
        %v804 = vpack.c.bf16 %v775, %v774
        %v805 = vpack.c.bf16 %v777, %v776
        %v806 = vpack.c.bf16 %v779, %v778
        %v807 = vpack.c.bf16 %v781, %v780
        %v808 = vpack.c.bf16 %v783, %v782
        %v809 = vpack.c.bf16 %v785, %v784
        %v810 = vpack.c.bf16 %v787, %v786
        %v811 = vpack.c.bf16 %v789, %v788
        %v812 = vpack.c.bf16 %v791, %v790
        %v813 = vpack.c.bf16 %v793, %v792
        %v814 = vpack.c.bf16 %v795, %v794
        %v815 = vpack.c.bf16 %v797, %v796
        %v816 = vpack.c.bf16 %v799, %v798
        %v817 = vpack.c.bf16 %v801, %v800
        %v818 = vld [vmem:[%s3] sm:$0xf]
        %v819 = vld [vmem:[%s3 + $0x4] sm:$0xf]
        %v820 = vld [vmem:[%s3 + $0x8] sm:$0xf]
        %v821 = vld [vmem:[%s3 + $0xc] sm:$0xf]
        %v822 = vld [vmem:[%s3 + $0x10] sm:$0xf]
        %v823 = vld [vmem:[%s3 + $0x14] sm:$0xf]
        %v824 = vld [vmem:[%s3 + $0x18] sm:$0xf]
        %v825 = vld [vmem:[%s3 + $0x1c] sm:$0xf]
        %v826 = vld [vmem:[%s3 + $0x20] sm:$0xf]
        %v827 = vld [vmem:[%s3 + $0x24] sm:$0xf]
        %v828 = vld [vmem:[%s3 + $0x28] sm:$0xf]
        %v829 = vld [vmem:[%s3 + $0x2c] sm:$0xf]
        %v830 = vld [vmem:[%s3 + $0x30] sm:$0xf]
        %v831 = vld [vmem:[%s3 + $0x34] sm:$0xf]
        %v832 = vld [vmem:[%s3 + $0x38] sm:$0xf]
        %v833 = vld [vmem:[%s3 + $0x3c] sm:$0xf]
        %v834 = vld [vmem:[%s4] sm:$0x1]
        %v836 = vperm.slane %v834, 0
        %v854 = vunpack.c.l.b16 %v818
        %v855 = vunpack.c.l.b16 %v819
        %v856 = vunpack.c.l.b16 %v820
        %v857 = vunpack.c.l.b16 %v821
        %v858 = vunpack.c.l.b16 %v822
        %v859 = vunpack.c.l.b16 %v823
        %v860 = vunpack.c.l.b16 %v824
        %v861 = vunpack.c.l.b16 %v825
        %v862 = vunpack.c.l.b16 %v826
        %v863 = vunpack.c.l.b16 %v827
        %v864 = vunpack.c.l.b16 %v828
        %v865 = vunpack.c.l.b16 %v829
        %v866 = vunpack.c.l.b16 %v830
        %v867 = vunpack.c.l.b16 %v831
        %v868 = vunpack.c.l.b16 %v832
        %v869 = vunpack.c.l.b16 %v833
        %v870 = vpack.c.b16 %v855, %v854
        %v871 = vpack.c.b16 %v857, %v856
        %v872 = vpack.c.b16 %v859, %v858
        %v873 = vpack.c.b16 %v861, %v860
        %v874 = vpack.c.b16 %v863, %v862
        %v875 = vpack.c.b16 %v865, %v864
        %v876 = vpack.c.b16 %v867, %v866
        %v877 = vpack.c.b16 %v869, %v868
        %886 = vmatpush.bf16.msra.mxu0 %v877
        %887 = vmatpush.bf16.msra.mxu0 %v876
        %888 = vmatpush.bf16.msra.mxu0 %v875
        %889 = vmatpush.bf16.msra.mxu0 %v874
        %890 = vmatpush.bf16.msra.mxu0 %v873
        %891 = vmatpush.bf16.msra.mxu0 %v872
        %892 = vmatpush.bf16.msra.mxu0 %v871
        %893 = vmatpush.bf16.msra.mxu0 %v870
        %894 = vmatmul.bf16.gmra.mxu0 %v802
        %v895 = vpop.f32.mrf.mxu0
        %v896 = vadd.f32 %v836, %v895
        %v897 = vpop.f32.mrf.mxu0
        %v898 = vadd.f32 %v836, %v897
        %899 = vmatmul.bf16.gmra.mxu0 %v803
        %v900 = vpop.f32.mrf.mxu0
        %v901 = vadd.f32 %v836, %v900
        %v902 = vpop.f32.mrf.mxu0
        %v903 = vadd.f32 %v836, %v902
        %904 = vmatmul.bf16.gmra.mxu0 %v804
        %v905 = vpop.f32.mrf.mxu0
        %v906 = vadd.f32 %v836, %v905
        %v907 = vpop.f32.mrf.mxu0
        %v908 = vadd.f32 %v836, %v907
        %909 = vmatmul.bf16.gmra.mxu0 %v805
        %v910 = vpop.f32.mrf.mxu0
        %v911 = vadd.f32 %v836, %v910
        %v912 = vpop.f32.mrf.mxu0
        %v913 = vadd.f32 %v836, %v912
        %914 = vmatmul.bf16.gmra.mxu0 %v806
        %v915 = vpop.f32.mrf.mxu0
        %v916 = vadd.f32 %v836, %v915
        %v917 = vpop.f32.mrf.mxu0
        %v918 = vadd.f32 %v836, %v917
        %919 = vmatmul.bf16.gmra.mxu0 %v807
        %v920 = vpop.f32.mrf.mxu0
        %v921 = vadd.f32 %v836, %v920
        %v922 = vpop.f32.mrf.mxu0
        %v923 = vadd.f32 %v836, %v922
        %924 = vmatmul.bf16.gmra.mxu0 %v808
        %v925 = vpop.f32.mrf.mxu0
        %v926 = vadd.f32 %v836, %v925
        %v927 = vpop.f32.mrf.mxu0
        %v928 = vadd.f32 %v836, %v927
        %929 = vmatmul.bf16.gmra.mxu0 %v809
        %v930 = vpop.f32.mrf.mxu0
        %v931 = vadd.f32 %v836, %v930
        %v932 = vpop.f32.mrf.mxu0
        %v933 = vadd.f32 %v836, %v932
        %934 = vmatmul.bf16.gmra.mxu0 %v810
        %v935 = vpop.f32.mrf.mxu0
        %v936 = vadd.f32 %v836, %v935
        %v937 = vpop.f32.mrf.mxu0
        %v938 = vadd.f32 %v836, %v937
        %939 = vmatmul.bf16.gmra.mxu0 %v811
        %v940 = vpop.f32.mrf.mxu0
        %v941 = vadd.f32 %v836, %v940
        %v942 = vpop.f32.mrf.mxu0
        %v943 = vadd.f32 %v836, %v942
        %944 = vmatmul.bf16.gmra.mxu0 %v812
        %v945 = vpop.f32.mrf.mxu0
        %v946 = vadd.f32 %v836, %v945
        %v947 = vpop.f32.mrf.mxu0
        %v948 = vadd.f32 %v836, %v947
        %949 = vmatmul.bf16.gmra.mxu0 %v813
        %v950 = vpop.f32.mrf.mxu0
        %v951 = vadd.f32 %v836, %v950
        %v952 = vpop.f32.mrf.mxu0
        %v953 = vadd.f32 %v836, %v952
        %954 = vmatmul.bf16.gmra.mxu0 %v814
        %v955 = vpop.f32.mrf.mxu0
        %v956 = vadd.f32 %v836, %v955
        %v957 = vpop.f32.mrf.mxu0
        %v958 = vadd.f32 %v836, %v957
        %959 = vmatmul.bf16.gmra.mxu0 %v815
        %v960 = vpop.f32.mrf.mxu0
        %v961 = vadd.f32 %v836, %v960
        %v962 = vpop.f32.mrf.mxu0
        %v963 = vadd.f32 %v836, %v962
        %964 = vmatmul.bf16.gmra.mxu0 %v816
        %v965 = vpop.f32.mrf.mxu0
        %v966 = vadd.f32 %v836, %v965
        %v967 = vpop.f32.mrf.mxu0
        %v968 = vadd.f32 %v836, %v967
        %969 = vmatmul.bf16.gmra.mxu0 %v817
        %v970 = vpop.f32.mrf.mxu0
        %v971 = vadd.f32 %v836, %v970
        %v972 = vpop.f32.mrf.mxu0
        %v973 = vadd.f32 %v836, %v972
        %974 = vdwg.mxu0
        %v975 = vmul.f32 %v896, 0.01
        %v976 = vmul.f32 %v898, 0.01
        %v977 = vmul.f32 %v901, 0.01
        %v978 = vmul.f32 %v903, 0.01
        %v979 = vmul.f32 %v906, 0.01
        %v980 = vmul.f32 %v908, 0.01
        %v981 = vmul.f32 %v911, 0.01
        %v982 = vmul.f32 %v913, 0.01
        %v983 = vmul.f32 %v916, 0.01
        %v984 = vmul.f32 %v918, 0.01
        %v985 = vmul.f32 %v921, 0.01
        %v986 = vmul.f32 %v923, 0.01
        %v987 = vmul.f32 %v926, 0.01
        %v988 = vmul.f32 %v928, 0.01
        %v989 = vmul.f32 %v931, 0.01
        %v990 = vmul.f32 %v933, 0.01
        %v991 = vmul.f32 %v936, 0.01
        %v992 = vmul.f32 %v938, 0.01
        %v993 = vmul.f32 %v941, 0.01
        %v994 = vmul.f32 %v943, 0.01
        %v995 = vmul.f32 %v946, 0.01
        %v996 = vmul.f32 %v948, 0.01
        %v997 = vmul.f32 %v951, 0.01
        %v998 = vmul.f32 %v953, 0.01
        %v999 = vmul.f32 %v956, 0.01
        %v1000 = vmul.f32 %v958, 0.01
        %v1001 = vmul.f32 %v961, 0.01
        %v1002 = vmul.f32 %v963, 0.01
        %v1003 = vmul.f32 %v966, 0.01
        %v1004 = vmul.f32 %v968, 0.01
        %v1005 = vmul.f32 %v971, 0.01
        %v1006 = vmul.f32 %v973, 0.01
        %v1007 = vmax.f32 %v896, %v975
        %v1008 = vmax.f32 %v898, %v976
        %v1009 = vmax.f32 %v901, %v977
        %v1010 = vmax.f32 %v903, %v978
        %v1011 = vmax.f32 %v906, %v979
        %v1012 = vmax.f32 %v908, %v980
        %v1013 = vmax.f32 %v911, %v981
        %v1014 = vmax.f32 %v913, %v982
        %v1015 = vmax.f32 %v916, %v983
        %v1016 = vmax.f32 %v918, %v984
        %v1017 = vmax.f32 %v921, %v985
        %v1018 = vmax.f32 %v923, %v986
        %v1019 = vmax.f32 %v926, %v987
        %v1020 = vmax.f32 %v928, %v988
        %v1021 = vmax.f32 %v931, %v989
        %v1022 = vmax.f32 %v933, %v990
        %v1023 = vmax.f32 %v936, %v991
        %v1024 = vmax.f32 %v938, %v992
        %v1025 = vmax.f32 %v941, %v993
        %v1026 = vmax.f32 %v943, %v994
        %v1027 = vmax.f32 %v946, %v995
        %v1028 = vmax.f32 %v948, %v996
        %v1029 = vmax.f32 %v951, %v997
        %v1030 = vmax.f32 %v953, %v998
        %v1031 = vmax.f32 %v956, %v999
        %v1032 = vmax.f32 %v958, %v1000
        %v1033 = vmax.f32 %v961, %v1001
        %v1034 = vmax.f32 %v963, %v1002
        %v1035 = vmax.f32 %v966, %v1003
        %v1036 = vmax.f32 %v968, %v1004
        %v1037 = vmax.f32 %v971, %v1005
        %v1038 = vmax.f32 %v973, %v1006
        %v1039 = vpack.c.bf16 %v1008, %v1007
        %v1040 = vpack.c.bf16 %v1010, %v1009
        %v1041 = vpack.c.bf16 %v1012, %v1011
        %v1042 = vpack.c.bf16 %v1014, %v1013
        %v1043 = vpack.c.bf16 %v1016, %v1015
        %v1044 = vpack.c.bf16 %v1018, %v1017
        %v1045 = vpack.c.bf16 %v1020, %v1019
        %v1046 = vpack.c.bf16 %v1022, %v1021
        %v1047 = vpack.c.bf16 %v1024, %v1023
        %v1048 = vpack.c.bf16 %v1026, %v1025
        %v1049 = vpack.c.bf16 %v1028, %v1027
        %v1050 = vpack.c.bf16 %v1030, %v1029
        %v1051 = vpack.c.bf16 %v1032, %v1031
        %v1052 = vpack.c.bf16 %v1034, %v1033
        %v1053 = vpack.c.bf16 %v1036, %v1035
        %v1054 = vpack.c.bf16 %v1038, %v1037
        %v1055 = vld [vmem:[%s5] sm:$0xf]
        %v1056 = vld [vmem:[%s5 + $0x4] sm:$0xf]
        %v1057 = vld [vmem:[%s5 + $0x8] sm:$0xf]
        %v1058 = vld [vmem:[%s5 + $0xc] sm:$0xf]
        %v1059 = vld [vmem:[%s5 + $0x10] sm:$0xf]
        %v1060 = vld [vmem:[%s5 + $0x14] sm:$0xf]
        %v1061 = vld [vmem:[%s5 + $0x18] sm:$0xf]
        %v1062 = vld [vmem:[%s5 + $0x1c] sm:$0xf]
        %v1063 = vld [vmem:[%s5 + $0x20] sm:$0xf]
        %v1064 = vld [vmem:[%s5 + $0x24] sm:$0xf]
        %v1065 = vld [vmem:[%s5 + $0x28] sm:$0xf]
        %v1066 = vld [vmem:[%s5 + $0x2c] sm:$0xf]
        %v1067 = vld [vmem:[%s5 + $0x30] sm:$0xf]
        %v1068 = vld [vmem:[%s5 + $0x34] sm:$0xf]
        %v1069 = vld [vmem:[%s5 + $0x38] sm:$0xf]
        %v1070 = vld [vmem:[%s5 + $0x3c] sm:$0xf]
        %v1071 = vld [vmem:[%s6] sm:$0x1]
        %v1073 = vperm.slane %v1071, 0
        %v1091 = vunpack.c.l.b16 %v1055
        %v1092 = vunpack.c.l.b16 %v1056
        %v1093 = vunpack.c.l.b16 %v1057
        %v1094 = vunpack.c.l.b16 %v1058
        %v1095 = vunpack.c.l.b16 %v1059
        %v1096 = vunpack.c.l.b16 %v1060
        %v1097 = vunpack.c.l.b16 %v1061
        %v1098 = vunpack.c.l.b16 %v1062
        %v1099 = vunpack.c.l.b16 %v1063
        %v1100 = vunpack.c.l.b16 %v1064
        %v1101 = vunpack.c.l.b16 %v1065
        %v1102 = vunpack.c.l.b16 %v1066
        %v1103 = vunpack.c.l.b16 %v1067
        %v1104 = vunpack.c.l.b16 %v1068
        %v1105 = vunpack.c.l.b16 %v1069
        %v1106 = vunpack.c.l.b16 %v1070
        %v1107 = vpack.c.b16 %v1092, %v1091
        %v1108 = vpack.c.b16 %v1094, %v1093
        %v1109 = vpack.c.b16 %v1096, %v1095
        %v1110 = vpack.c.b16 %v1098, %v1097
        %v1111 = vpack.c.b16 %v1100, %v1099
        %v1112 = vpack.c.b16 %v1102, %v1101
        %v1113 = vpack.c.b16 %v1104, %v1103
        %v1114 = vpack.c.b16 %v1106, %v1105
        %1123 = vmatpush.bf16.msra.mxu0 %v1114
        %1124 = vmatpush.bf16.msra.mxu0 %v1113
        %1125 = vmatpush.bf16.msra.mxu0 %v1112
        %1126 = vmatpush.bf16.msra.mxu0 %v1111
        %1127 = vmatpush.bf16.msra.mxu0 %v1110
        %1128 = vmatpush.bf16.msra.mxu0 %v1109
        %1129 = vmatpush.bf16.msra.mxu0 %v1108
        %1130 = vmatpush.bf16.msra.mxu0 %v1107
        %1131 = vmatmul.bf16.gmra.mxu0 %v1039
        %v1132 = vpop.f32.mrf.mxu0
        %v1133 = vadd.f32 %v1073, %v1132
        %v1134 = vpop.f32.mrf.mxu0
        %v1135 = vadd.f32 %v1073, %v1134
        %1136 = vmatmul.bf16.gmra.mxu0 %v1040
        %v1137 = vpop.f32.mrf.mxu0
        %v1138 = vadd.f32 %v1073, %v1137
        %v1139 = vpop.f32.mrf.mxu0
        %v1140 = vadd.f32 %v1073, %v1139
        %1141 = vmatmul.bf16.gmra.mxu0 %v1041
        %v1142 = vpop.f32.mrf.mxu0
        %v1143 = vadd.f32 %v1073, %v1142
        %v1144 = vpop.f32.mrf.mxu0
        %v1145 = vadd.f32 %v1073, %v1144
        %1146 = vmatmul.bf16.gmra.mxu0 %v1042
        %v1147 = vpop.f32.mrf.mxu0
        %v1148 = vadd.f32 %v1073, %v1147
        %v1149 = vpop.f32.mrf.mxu0
        %v1150 = vadd.f32 %v1073, %v1149
        %1151 = vmatmul.bf16.gmra.mxu0 %v1043
        %v1152 = vpop.f32.mrf.mxu0
        %v1153 = vadd.f32 %v1073, %v1152
        %v1154 = vpop.f32.mrf.mxu0
        %v1155 = vadd.f32 %v1073, %v1154
        %1156 = vmatmul.bf16.gmra.mxu0 %v1044
        %v1157 = vpop.f32.mrf.mxu0
        %v1158 = vadd.f32 %v1073, %v1157
        %v1159 = vpop.f32.mrf.mxu0
        %v1160 = vadd.f32 %v1073, %v1159
        %1161 = vmatmul.bf16.gmra.mxu0 %v1045
        %v1162 = vpop.f32.mrf.mxu0
        %v1163 = vadd.f32 %v1073, %v1162
        %v1164 = vpop.f32.mrf.mxu0
        %v1165 = vadd.f32 %v1073, %v1164
        %1166 = vmatmul.bf16.gmra.mxu0 %v1046
        %v1167 = vpop.f32.mrf.mxu0
        %v1168 = vadd.f32 %v1073, %v1167
        %v1169 = vpop.f32.mrf.mxu0
        %v1170 = vadd.f32 %v1073, %v1169
        %1171 = vmatmul.bf16.gmra.mxu0 %v1047
        %v1172 = vpop.f32.mrf.mxu0
        %v1173 = vadd.f32 %v1073, %v1172
        %v1174 = vpop.f32.mrf.mxu0
        %v1175 = vadd.f32 %v1073, %v1174
        %1176 = vmatmul.bf16.gmra.mxu0 %v1048
        %v1177 = vpop.f32.mrf.mxu0
        %v1178 = vadd.f32 %v1073, %v1177
        %v1179 = vpop.f32.mrf.mxu0
        %v1180 = vadd.f32 %v1073, %v1179
        %1181 = vmatmul.bf16.gmra.mxu0 %v1049
        %v1182 = vpop.f32.mrf.mxu0
        %v1183 = vadd.f32 %v1073, %v1182
        %v1184 = vpop.f32.mrf.mxu0
        %v1185 = vadd.f32 %v1073, %v1184
        %1186 = vmatmul.bf16.gmra.mxu0 %v1050
        %v1187 = vpop.f32.mrf.mxu0
        %v1188 = vadd.f32 %v1073, %v1187
        %v1189 = vpop.f32.mrf.mxu0
        %v1190 = vadd.f32 %v1073, %v1189
        %1191 = vmatmul.bf16.gmra.mxu0 %v1051
        %v1192 = vpop.f32.mrf.mxu0
        %v1193 = vadd.f32 %v1073, %v1192
        %v1194 = vpop.f32.mrf.mxu0
        %v1195 = vadd.f32 %v1073, %v1194
        %1196 = vmatmul.bf16.gmra.mxu0 %v1052
        %v1197 = vpop.f32.mrf.mxu0
        %v1198 = vadd.f32 %v1073, %v1197
        %v1199 = vpop.f32.mrf.mxu0
        %v1200 = vadd.f32 %v1073, %v1199
        %1201 = vmatmul.bf16.gmra.mxu0 %v1053
        %v1202 = vpop.f32.mrf.mxu0
        %v1203 = vadd.f32 %v1073, %v1202
        %v1204 = vpop.f32.mrf.mxu0
        %v1205 = vadd.f32 %v1073, %v1204
        %1206 = vmatmul.bf16.gmra.mxu0 %v1054
        %v1207 = vpop.f32.mrf.mxu0
        %v1208 = vadd.f32 %v1073, %v1207
        %v1209 = vpop.f32.mrf.mxu0
        %v1210 = vadd.f32 %v1073, %v1209
        %1211 = vdwg.mxu0
        %vm1212 = vcmask 48128
        %1213 = vst.msk [vmem:[%s320] sm:$0xff] %vm1212, %v1133
        %1214 = vst.msk [vmem:[%s320 + $0x8] sm:$0xff] %vm1212, %v1135
        %1215 = vst.msk [vmem:[%s320 + $0x10] sm:$0xff] %vm1212, %v1138
        %1216 = vst.msk [vmem:[%s320 + $0x18] sm:$0xff] %vm1212, %v1140
        %1217 = vst.msk [vmem:[%s320 + $0x20] sm:$0xff] %vm1212, %v1143
        %1218 = vst.msk [vmem:[%s320 + $0x28] sm:$0xff] %vm1212, %v1145
        %1219 = vst.msk [vmem:[%s320 + $0x30] sm:$0xff] %vm1212, %v1148
        %1220 = vst.msk [vmem:[%s320 + $0x38] sm:$0xff] %vm1212, %v1150
        %1221 = vst.msk [vmem:[%s320 + $0x40] sm:$0xff] %vm1212, %v1153
        %1222 = vst.msk [vmem:[%s320 + $0x48] sm:$0xff] %vm1212, %v1155
        %1223 = vst.msk [vmem:[%s320 + $0x50] sm:$0xff] %vm1212, %v1158
        %1224 = vst.msk [vmem:[%s320 + $0x58] sm:$0xff] %vm1212, %v1160
        %1225 = vst.msk [vmem:[%s320 + $0x60] sm:$0xff] %vm1212, %v1163
        %1226 = vst.msk [vmem:[%s320 + $0x68] sm:$0xff] %vm1212, %v1165
        %1227 = vst.msk [vmem:[%s320 + $0x70] sm:$0xff] %vm1212, %v1168
        %1228 = vst.msk [vmem:[%s320 + $0x78] sm:$0xff] %vm1212, %v1170
        %1229 = vst.msk [vmem:[%s320 + $0x80] sm:$0xff] %vm1212, %v1173
        %1230 = vst.msk [vmem:[%s320 + $0x88] sm:$0xff] %vm1212, %v1175
        %1231 = vst.msk [vmem:[%s320 + $0x90] sm:$0xff] %vm1212, %v1178
        %1232 = vst.msk [vmem:[%s320 + $0x98] sm:$0xff] %vm1212, %v1180
        %1233 = vst.msk [vmem:[%s320 + $0xa0] sm:$0xff] %vm1212, %v1183
        %1234 = vst.msk [vmem:[%s320 + $0xa8] sm:$0xff] %vm1212, %v1185
        %1235 = vst.msk [vmem:[%s320 + $0xb0] sm:$0xff] %vm1212, %v1188
        %1236 = vst.msk [vmem:[%s320 + $0xb8] sm:$0xff] %vm1212, %v1190
        %1237 = vst.msk [vmem:[%s320 + $0xc0] sm:$0xff] %vm1212, %v1193
        %1238 = vst.msk [vmem:[%s320 + $0xc8] sm:$0xff] %vm1212, %v1195
        %1239 = vst.msk [vmem:[%s320 + $0xd0] sm:$0xff] %vm1212, %v1198
        %1240 = vst.msk [vmem:[%s320 + $0xd8] sm:$0xff] %vm1212, %v1200
        %1241 = vst.msk [vmem:[%s320 + $0xe0] sm:$0xff] %vm1212, %v1203
        %1242 = vst.msk [vmem:[%s320 + $0xe8] sm:$0xff] %vm1212, %v1205
        %1243 = vst.msk [vmem:[%s320 + $0xf0] sm:$0xff] %vm1212, %v1208
        %1244 = vst.msk [vmem:[%s320 + $0xf8] sm:$0xff] %vm1212, %v1210
        %s1245 = sand.u32 %s182, 1
        %s1246 = sand.u32 %s182, 1
        %s1247 = smul.addr %s1246, 256
        %s1248 = scalar_lea.vmem [#allocation6], %s1247
        // Predicated region
        $region57: #{ec_predictor_forward.1} parent=47 // pred_check
          %p1249 = pneg %p192
        $region58: #{ec_predictor_forward.1} parent=47 // pred_check_branch
          %1251 = sbr.rel (%p1249) target = $region60
        $region59: #{ec_predictor_forward.1} parent=47 // pred_region
          %s1252 = smul.u32 32, %s22
          %s1253 = ssub.s32 63, %s1252
          %p1254 = scmp.lt.s32.totalorder %s1253, 32
          %s1255 = scalar_select %p1254, %s1253, 32
          %s1256 = smul.u32 8, %s1255
          %p1257 = scmp.ne.s32.totalorder 0, %s1256
          %s1258 = smul.addr %s1252, 8
          %s1259 = scalar_lea.vmem %s7, %s1258
          // Predicated region
          $region61: #{ec_predictor_forward.1} parent=59 // pred_check
            %p1260 = pneg %p1257
          $region62: #{ec_predictor_forward.1} parent=59 // pred_check_branch
            %1262 = sbr.rel (%p1260) target = $region64
          $region63: #{ec_predictor_forward.1} parent=59 // pred_region
            // Predicated region
            $region65: #{ec_predictor_forward.1} parent=63 // pred_check
              _
            $region66: #{ec_predictor_forward.1} parent=63 // pred_check_branch
              %1264 = sbr.rel (0) target = $region68
            $region67: #{ec_predictor_forward.1} parent=63 // pred_region
              // Predicated region
              $region87: #{ec_predictor_forward.1} parent=67 // pred_check
                _
              $region88: #{ec_predictor_forward.1} parent=67 // pred_check_branch
                %1376 = sbr.rel (0) target = $region90
              $region89: #{ec_predictor_forward.1} parent=67 // pred_region
                %s1377 = sshrl.u32 %s1255, 5
                // While loop
                $region91: #{ec_predictor_forward.1} parent=89 // loop_pre_header
                  _
                $region92: #{ec_predictor_forward.1} parent=89 // loop_header
                  %s1379 = sphi 0, %s1381
                  %p1380 = scmp.ge.s32.totalorder %s1379, %s1377
                  %s1384 = sphi 0, %s1453
                  %s1385 = sphi %s1248, %s1456
                  %s1386 = sphi %s1259, %s1457
                $region93: #{ec_predictor_forward.1} parent=89 // loop_header_branch
                  %1383 = sbr.rel (%p1380) target = $region97
                $region94: #{ec_predictor_forward.1} parent=89 // loop_body
                  %v1387 = vld [vmem:[%s1385] sm:$0xff]
                  %1388 = vst [vmem:[%s1386] sm:$0xff] %v1387
                  %v1389 = vld [vmem:[%s1385 + $0x8] sm:$0xff]
                  %1390 = vst [vmem:[%s1386 + $0x8] sm:$0xff] %v1389
                  %v1391 = vld [vmem:[%s1385 + $0x10] sm:$0xff]
                  %1392 = vst [vmem:[%s1386 + $0x10] sm:$0xff] %v1391
                  %v1393 = vld [vmem:[%s1385 + $0x18] sm:$0xff]
                  %1394 = vst [vmem:[%s1386 + $0x18] sm:$0xff] %v1393
                  %v1395 = vld [vmem:[%s1385 + $0x20] sm:$0xff]
                  %1396 = vst [vmem:[%s1386 + $0x20] sm:$0xff] %v1395
                  %v1397 = vld [vmem:[%s1385 + $0x28] sm:$0xff]
                  %1398 = vst [vmem:[%s1386 + $0x28] sm:$0xff] %v1397
                  %v1399 = vld [vmem:[%s1385 + $0x30] sm:$0xff]
                  %1400 = vst [vmem:[%s1386 + $0x30] sm:$0xff] %v1399
                  %v1401 = vld [vmem:[%s1385 + $0x38] sm:$0xff]
                  %1402 = vst [vmem:[%s1386 + $0x38] sm:$0xff] %v1401
                  %v1403 = vld [vmem:[%s1385 + $0x40] sm:$0xff]
                  %1404 = vst [vmem:[%s1386 + $0x40] sm:$0xff] %v1403
                  %v1405 = vld [vmem:[%s1385 + $0x48] sm:$0xff]
                  %1406 = vst [vmem:[%s1386 + $0x48] sm:$0xff] %v1405
                  %v1407 = vld [vmem:[%s1385 + $0x50] sm:$0xff]
                  %1408 = vst [vmem:[%s1386 + $0x50] sm:$0xff] %v1407
                  %v1409 = vld [vmem:[%s1385 + $0x58] sm:$0xff]
                  %1410 = vst [vmem:[%s1386 + $0x58] sm:$0xff] %v1409
                  %v1411 = vld [vmem:[%s1385 + $0x60] sm:$0xff]
                  %1412 = vst [vmem:[%s1386 + $0x60] sm:$0xff] %v1411
                  %v1413 = vld [vmem:[%s1385 + $0x68] sm:$0xff]
                  %1414 = vst [vmem:[%s1386 + $0x68] sm:$0xff] %v1413
                  %v1415 = vld [vmem:[%s1385 + $0x70] sm:$0xff]
                  %1416 = vst [vmem:[%s1386 + $0x70] sm:$0xff] %v1415
                  %v1417 = vld [vmem:[%s1385 + $0x78] sm:$0xff]
                  %1418 = vst [vmem:[%s1386 + $0x78] sm:$0xff] %v1417
                  %v1419 = vld [vmem:[%s1385 + $0x80] sm:$0xff]
                  %1420 = vst [vmem:[%s1386 + $0x80] sm:$0xff] %v1419
                  %v1421 = vld [vmem:[%s1385 + $0x88] sm:$0xff]
                  %1422 = vst [vmem:[%s1386 + $0x88] sm:$0xff] %v1421
                  %v1423 = vld [vmem:[%s1385 + $0x90] sm:$0xff]
                  %1424 = vst [vmem:[%s1386 + $0x90] sm:$0xff] %v1423
                  %v1425 = vld [vmem:[%s1385 + $0x98] sm:$0xff]
                  %1426 = vst [vmem:[%s1386 + $0x98] sm:$0xff] %v1425
                  %v1427 = vld [vmem:[%s1385 + $0xa0] sm:$0xff]
                  %1428 = vst [vmem:[%s1386 + $0xa0] sm:$0xff] %v1427
                  %v1429 = vld [vmem:[%s1385 + $0xa8] sm:$0xff]
                  %1430 = vst [vmem:[%s1386 + $0xa8] sm:$0xff] %v1429
                  %v1431 = vld [vmem:[%s1385 + $0xb0] sm:$0xff]
                  %1432 = vst [vmem:[%s1386 + $0xb0] sm:$0xff] %v1431
                  %v1433 = vld [vmem:[%s1385 + $0xb8] sm:$0xff]
                  %1434 = vst [vmem:[%s1386 + $0xb8] sm:$0xff] %v1433
                  %v1435 = vld [vmem:[%s1385 + $0xc0] sm:$0xff]
                  %1436 = vst [vmem:[%s1386 + $0xc0] sm:$0xff] %v1435
                  %v1437 = vld [vmem:[%s1385 + $0xc8] sm:$0xff]
                  %1438 = vst [vmem:[%s1386 + $0xc8] sm:$0xff] %v1437
                  %v1439 = vld [vmem:[%s1385 + $0xd0] sm:$0xff]
                  %1440 = vst [vmem:[%s1386 + $0xd0] sm:$0xff] %v1439
                  %v1441 = vld [vmem:[%s1385 + $0xd8] sm:$0xff]
                  %1442 = vst [vmem:[%s1386 + $0xd8] sm:$0xff] %v1441
                  %v1443 = vld [vmem:[%s1385 + $0xe0] sm:$0xff]
                  %1444 = vst [vmem:[%s1386 + $0xe0] sm:$0xff] %v1443
                  %v1445 = vld [vmem:[%s1385 + $0xe8] sm:$0xff]
                  %1446 = vst [vmem:[%s1386 + $0xe8] sm:$0xff] %v1445
                  %v1447 = vld [vmem:[%s1385 + $0xf0] sm:$0xff]
                  %1448 = vst [vmem:[%s1386 + $0xf0] sm:$0xff] %v1447
                  %v1449 = vld [vmem:[%s1385 + $0xf8] sm:$0xff]
                  %1450 = vst [vmem:[%s1386 + $0xf8] sm:$0xff] %v1449
                  %s1451 = sadd.s32 1, %s1384
                  %p1452 = scmp.ge.s32.totalorder %s1451, %s1377
                  %s1453 = scalar_select %p1452, 0, %s1451
                  %s1454 = smul.u32 %s1453, 256
                  %s1455 = smul.u32 %s1453, 256
                  %s1456 = scalar_lea.vmem %s1248, %s1454 [#allocation6]
                  %s1457 = scalar_lea.vmem %s1259, %s1455
                $region95: #{ec_predictor_forward.1} parent=89 // loop_footer
                  %s1381 = sadd.s32 %s1379, 1
                $region96: #{ec_predictor_forward.1} parent=89 // loop_footer_branch
                  %1378 = sbr.rel target = $region92
                $region97: #{ec_predictor_forward.1} parent=89 // loop_exit
                  _
                %s1458 = sshrl.u32 %s1255, 5
                %s1459 = sand.u32 %s1255, 31
                %s1460 = smul.u32 %s1458, 32
                %s1461 = smul.u32 8, %s1460
                %s1462 = scalar_lea.vmem %s1248, %s1461 [#allocation6]
                %s1463 = smul.u32 8, %s1460
                %s1464 = scalar_lea.vmem %s1259, %s1463
                // While loop
                $region98: #{ec_predictor_forward.1} parent=89 // loop_pre_header
                  _
                $region99: #{ec_predictor_forward.1} parent=89 // loop_header
                  %s1466 = sphi 0, %s1468
                  %p1467 = scmp.ge.s32.totalorder %s1466, %s1459
                  %s1471 = sphi 0, %s1478
                  %s1472 = sphi %s1462, %s1481
                  %s1473 = sphi %s1464, %s1482
                $region100: #{ec_predictor_forward.1} parent=89 // loop_header_branch
                  %1470 = sbr.rel (%p1467) target = $region104
                $region101: #{ec_predictor_forward.1} parent=89 // loop_body
                  %v1474 = vld [vmem:[%s1472] sm:$0xff]
                  %1475 = vst [vmem:[%s1473] sm:$0xff] %v1474
                  %s1476 = sadd.s32 1, %s1471
                  %p1477 = scmp.ge.s32.totalorder %s1476, %s1459
                  %s1478 = scalar_select %p1477, 0, %s1476
                  %s1479 = smul.u32 %s1478, 8
                  %s1480 = smul.u32 %s1478, 8
                  %s1481 = scalar_lea.vmem %s1462, %s1479 [#allocation6]
                  %s1482 = scalar_lea.vmem %s1464, %s1480
                $region102: #{ec_predictor_forward.1} parent=89 // loop_footer
                  %s1468 = sadd.s32 %s1466, 1
                $region103: #{ec_predictor_forward.1} parent=89 // loop_footer_branch
                  %1465 = sbr.rel target = $region99
                $region104: #{ec_predictor_forward.1} parent=89 // loop_exit
                  _
              $region90: #{ec_predictor_forward.1} parent=67 // pred_fallthru
                _
              // Predicated region
              $region105: #{ec_predictor_forward.1} parent=67 // pred_check
                _
              $region106: #{ec_predictor_forward.1} parent=67 // pred_check_branch
                %1484 = sbr.rel target = $region108
              $region107: #{ec_predictor_forward.1} parent=67 // pred_region
                _
              $region108: #{ec_predictor_forward.1} parent=67 // pred_fallthru
                _
            $region68: #{ec_predictor_forward.1} parent=63 // pred_fallthru
              _
            // Predicated region
            $region69: #{ec_predictor_forward.1} parent=63 // pred_check
              _
            $region70: #{ec_predictor_forward.1} parent=63 // pred_check_branch
              %1266 = sbr.rel target = $region72
            $region71: #{ec_predictor_forward.1} parent=63 // pred_region
              %s1268 = ssub.s32 256, 1
              %s1269 = sshrl.u32 %s1255, 5
              // While loop
              $region73: #{ec_predictor_forward.1} parent=71 // loop_pre_header
                _
              $region74: #{ec_predictor_forward.1} parent=71 // loop_header
                %s1271 = sphi 0, %s1273
                %p1272 = scmp.ge.s32.totalorder %s1271, %s1269
                %s1276 = sphi 0, %s1345
                %s1277 = sphi %s1248, %s1348
                %s1278 = sphi %s1259, %s1349
              $region75: #{ec_predictor_forward.1} parent=71 // loop_header_branch
                %1275 = sbr.rel (%p1272) target = $region79
              $region76: #{ec_predictor_forward.1} parent=71 // loop_body
                %v1279 = vld [vmem:[%s1277] sm:%s1268]
                %1280 = vst [vmem:[%s1278] sm:%s1268] %v1279
                %v1281 = vld [vmem:[%s1277 + $0x8] sm:%s1268]
                %1282 = vst [vmem:[%s1278 + $0x8] sm:%s1268] %v1281
                %v1283 = vld [vmem:[%s1277 + $0x10] sm:%s1268]
                %1284 = vst [vmem:[%s1278 + $0x10] sm:%s1268] %v1283
                %v1285 = vld [vmem:[%s1277 + $0x18] sm:%s1268]
                %1286 = vst [vmem:[%s1278 + $0x18] sm:%s1268] %v1285
                %v1287 = vld [vmem:[%s1277 + $0x20] sm:%s1268]
                %1288 = vst [vmem:[%s1278 + $0x20] sm:%s1268] %v1287
                %v1289 = vld [vmem:[%s1277 + $0x28] sm:%s1268]
                %1290 = vst [vmem:[%s1278 + $0x28] sm:%s1268] %v1289
                %v1291 = vld [vmem:[%s1277 + $0x30] sm:%s1268]
                %1292 = vst [vmem:[%s1278 + $0x30] sm:%s1268] %v1291
                %v1293 = vld [vmem:[%s1277 + $0x38] sm:%s1268]
                %1294 = vst [vmem:[%s1278 + $0x38] sm:%s1268] %v1293
                %v1295 = vld [vmem:[%s1277 + $0x40] sm:%s1268]
                %1296 = vst [vmem:[%s1278 + $0x40] sm:%s1268] %v1295
                %v1297 = vld [vmem:[%s1277 + $0x48] sm:%s1268]
                %1298 = vst [vmem:[%s1278 + $0x48] sm:%s1268] %v1297
                %v1299 = vld [vmem:[%s1277 + $0x50] sm:%s1268]
                %1300 = vst [vmem:[%s1278 + $0x50] sm:%s1268] %v1299
                %v1301 = vld [vmem:[%s1277 + $0x58] sm:%s1268]
                %1302 = vst [vmem:[%s1278 + $0x58] sm:%s1268] %v1301
                %v1303 = vld [vmem:[%s1277 + $0x60] sm:%s1268]
                %1304 = vst [vmem:[%s1278 + $0x60] sm:%s1268] %v1303
                %v1305 = vld [vmem:[%s1277 + $0x68] sm:%s1268]
                %1306 = vst [vmem:[%s1278 + $0x68] sm:%s1268] %v1305
                %v1307 = vld [vmem:[%s1277 + $0x70] sm:%s1268]
                %1308 = vst [vmem:[%s1278 + $0x70] sm:%s1268] %v1307
                %v1309 = vld [vmem:[%s1277 + $0x78] sm:%s1268]
                %1310 = vst [vmem:[%s1278 + $0x78] sm:%s1268] %v1309
                %v1311 = vld [vmem:[%s1277 + $0x80] sm:%s1268]
                %1312 = vst [vmem:[%s1278 + $0x80] sm:%s1268] %v1311
                %v1313 = vld [vmem:[%s1277 + $0x88] sm:%s1268]
                %1314 = vst [vmem:[%s1278 + $0x88] sm:%s1268] %v1313
                %v1315 = vld [vmem:[%s1277 + $0x90] sm:%s1268]
                %1316 = vst [vmem:[%s1278 + $0x90] sm:%s1268] %v1315
                %v1317 = vld [vmem:[%s1277 + $0x98] sm:%s1268]
                %1318 = vst [vmem:[%s1278 + $0x98] sm:%s1268] %v1317
                %v1319 = vld [vmem:[%s1277 + $0xa0] sm:%s1268]
                %1320 = vst [vmem:[%s1278 + $0xa0] sm:%s1268] %v1319
                %v1321 = vld [vmem:[%s1277 + $0xa8] sm:%s1268]
                %1322 = vst [vmem:[%s1278 + $0xa8] sm:%s1268] %v1321
                %v1323 = vld [vmem:[%s1277 + $0xb0] sm:%s1268]
                %1324 = vst [vmem:[%s1278 + $0xb0] sm:%s1268] %v1323
                %v1325 = vld [vmem:[%s1277 + $0xb8] sm:%s1268]
                %1326 = vst [vmem:[%s1278 + $0xb8] sm:%s1268] %v1325
                %v1327 = vld [vmem:[%s1277 + $0xc0] sm:%s1268]
                %1328 = vst [vmem:[%s1278 + $0xc0] sm:%s1268] %v1327
                %v1329 = vld [vmem:[%s1277 + $0xc8] sm:%s1268]
                %1330 = vst [vmem:[%s1278 + $0xc8] sm:%s1268] %v1329
                %v1331 = vld [vmem:[%s1277 + $0xd0] sm:%s1268]
                %1332 = vst [vmem:[%s1278 + $0xd0] sm:%s1268] %v1331
                %v1333 = vld [vmem:[%s1277 + $0xd8] sm:%s1268]
                %1334 = vst [vmem:[%s1278 + $0xd8] sm:%s1268] %v1333
                %v1335 = vld [vmem:[%s1277 + $0xe0] sm:%s1268]
                %1336 = vst [vmem:[%s1278 + $0xe0] sm:%s1268] %v1335
                %v1337 = vld [vmem:[%s1277 + $0xe8] sm:%s1268]
                %1338 = vst [vmem:[%s1278 + $0xe8] sm:%s1268] %v1337
                %v1339 = vld [vmem:[%s1277 + $0xf0] sm:%s1268]
                %1340 = vst [vmem:[%s1278 + $0xf0] sm:%s1268] %v1339
                %v1341 = vld [vmem:[%s1277 + $0xf8] sm:%s1268]
                %1342 = vst [vmem:[%s1278 + $0xf8] sm:%s1268] %v1341
                %s1343 = sadd.s32 1, %s1276
                %p1344 = scmp.ge.s32.totalorder %s1343, %s1269
                %s1345 = scalar_select %p1344, 0, %s1343
                %s1346 = smul.u32 %s1345, 256
                %s1347 = smul.u32 %s1345, 256
                %s1348 = scalar_lea.vmem %s1248, %s1346 [#allocation6]
                %s1349 = scalar_lea.vmem %s1259, %s1347
              $region77: #{ec_predictor_forward.1} parent=71 // loop_footer
                %s1273 = sadd.s32 %s1271, 1
              $region78: #{ec_predictor_forward.1} parent=71 // loop_footer_branch
                %1270 = sbr.rel target = $region74
              $region79: #{ec_predictor_forward.1} parent=71 // loop_exit
                _
              %s1350 = sshrl.u32 %s1255, 5
              %s1351 = sand.u32 %s1255, 31
              %s1352 = smul.u32 %s1350, 32
              %s1353 = smul.u32 8, %s1352
              %s1354 = scalar_lea.vmem %s1248, %s1353 [#allocation6]
              %s1355 = smul.u32 8, %s1352
              %s1356 = scalar_lea.vmem %s1259, %s1355
              // While loop
              $region80: #{ec_predictor_forward.1} parent=71 // loop_pre_header
                _
              $region81: #{ec_predictor_forward.1} parent=71 // loop_header
                %s1358 = sphi 0, %s1360
                %p1359 = scmp.ge.s32.totalorder %s1358, %s1351
                %s1363 = sphi 0, %s1370
                %s1364 = sphi %s1354, %s1373
                %s1365 = sphi %s1356, %s1374
              $region82: #{ec_predictor_forward.1} parent=71 // loop_header_branch
                %1362 = sbr.rel (%p1359) target = $region86
              $region83: #{ec_predictor_forward.1} parent=71 // loop_body
                %v1366 = vld [vmem:[%s1364] sm:%s1268]
                %1367 = vst [vmem:[%s1365] sm:%s1268] %v1366
                %s1368 = sadd.s32 1, %s1363
                %p1369 = scmp.ge.s32.totalorder %s1368, %s1351
                %s1370 = scalar_select %p1369, 0, %s1368
                %s1371 = smul.u32 %s1370, 8
                %s1372 = smul.u32 %s1370, 8
                %s1373 = scalar_lea.vmem %s1354, %s1371 [#allocation6]
                %s1374 = scalar_lea.vmem %s1356, %s1372
              $region84: #{ec_predictor_forward.1} parent=71 // loop_footer
                %s1360 = sadd.s32 %s1358, 1
              $region85: #{ec_predictor_forward.1} parent=71 // loop_footer_branch
                %1357 = sbr.rel target = $region81
              $region86: #{ec_predictor_forward.1} parent=71 // loop_exit
                _
            $region72: #{ec_predictor_forward.1} parent=63 // pred_fallthru
              _
          $region64: #{ec_predictor_forward.1} parent=59 // pred_fallthru
            _
          %1485 = vnop
        $region60: #{ec_predictor_forward.1} parent=47 // pred_fallthru
          _
      $region48: #{ec_predictor_forward.1} parent=5 // pred_fallthru
        _
      %p1486 = scmp.le.s32.totalorder 2, %s17
      // Predicated region
      $region109: #{ec_predictor_forward.1} parent=5 // pred_check
        %p1487 = pneg %p1486
      $region110: #{ec_predictor_forward.1} parent=5 // pred_check_branch
        %1489 = sbr.rel (%p1487) target = $region112
      $region111: #{ec_predictor_forward.1} parent=5 // pred_region
        %s1490 = ssub.s32 %s17, 2
        // Predicated region
        $region113: #{ec_predictor_forward.1} parent=111 // pred_check
          %p1491 = pneg %p198
        $region114: #{ec_predictor_forward.1} parent=111 // pred_check_branch
          %1493 = sbr.rel (%p1491) target = $region116
        $region115: #{ec_predictor_forward.1} parent=111 // pred_region
          %s1494 = sand.u32 %s183, 1
          %s1495 = sand.u32 %s183, 1
          %s1496 = smul.addr %s1495, 256
          %s1497 = scalar_lea.vmem [#allocation6], %s1496
        $region116: #{ec_predictor_forward.1} parent=111 // pred_fallthru
          _
      $region112: #{ec_predictor_forward.1} parent=5 // pred_fallthru
        _
    $region6: #{ec_predictor_forward.1} parent=1 // loop_footer
      %s21 = sadd.s32 1, %s17
    $region7: #{ec_predictor_forward.1} parent=1 // loop_footer_branch
      %16 = sbr.rel target = $region3
    $region8: #{ec_predictor_forward.1} parent=1 // loop_exit
      _
    %1498 = vsyncpa [#allocation3], 1
    %s1499 = scalar_lea.sflag [#allocation3], 1
    %1500 = vsyncpa %s1499, 1
    %1501 = vsyncpa [#allocation5], 1

</llo_original>
